<compile_context>
chip_gen: v5e
topology: v5e:2x2
jax: 0.10.0
libtpu: 0.0.40
codegen_flags: <defaults>
</compile_context>

<pallas_src>
import functools

import jax
import jax.numpy as jnp
from jax.experimental import pallas as pl
from jax.experimental.pallas import tpu as pltpu

_LANE = 128


def _round_up(v, m):
    return (v + m - 1) // m * m


def _gcn_kernel(x_ref, a_ref,
                w1_ref, b1_ref, g1_ref, be1_ref,
                w2_ref, b2_ref, g2_ref, be2_ref,
                o_ref,
                *, h_dim, out_dim, ax_first):
    """One grid step: Gb graphs, nodes padded to Np, feature dims padded to 128."""
    eps = 1e-5
    inv_h = 1.0 / h_dim
    inv_o = 1.0 / out_dim

    gb, n_p, f_p = x_ref.shape
    rows = gb * n_p

    a = a_ref[...]                              # (Gb, Np, Np) bf16
    x = x_ref[...]                              # (Gb, Np, Fp) bf16

    # --- GCNConv 1 -----------------------------------------------------------
    # Weight matmuls on the flattened (Gb*Np, F) operand (full MXU row panels);
    # adjacency contraction stays per-graph via a batched einsum.
    if ax_first:                                # Fin < H: (A @ x) @ W1
        t = jnp.einsum('gij,gjf->gif', a, x,
                       preferred_element_type=jnp.float32)
        h = jnp.dot(t.reshape(rows, f_p).astype(jnp.bfloat16), w1_ref[...],
                    preferred_element_type=jnp.float32)          # (rows, Hp)
    else:                                       # A @ (x @ W1)
        t = jnp.dot(x.reshape(rows, f_p), w1_ref[...],
                    preferred_element_type=jnp.float32)
        h = jnp.einsum('gij,gjf->gif', a,
                       t.reshape(gb, n_p, -1).astype(jnp.bfloat16),
                       preferred_element_type=jnp.float32)
        h = h.reshape(rows, -1)
    h = jnp.maximum(h + b1_ref[...], 0.0)       # (rows, Hp) f32; padded cols == 0

    # --- LayerNorm 1 (stats over the real h_dim; padded columns are zero) ---
    mu = jnp.sum(h, axis=-1, keepdims=True) * inv_h
    ex2 = jnp.sum(h * h, axis=-1, keepdims=True) * inv_h
    var = jnp.maximum(ex2 - mu * mu, 0.0)
    h = (h - mu) * jax.lax.rsqrt(var + eps) * g1_ref[...] + be1_ref[...]

    # --- GCNConv 2: A @ (h @ W2) + b2 ----------------------------------------
    y = jnp.dot(h.astype(jnp.bfloat16), w2_ref[...],
                preferred_element_type=jnp.float32)               # (rows, Op)
    y = jnp.einsum('gij,gjf->gif', a,
                   y.reshape(gb, n_p, -1).astype(jnp.bfloat16),
                   preferred_element_type=jnp.float32)
    y = y.reshape(rows, -1) + b2_ref[...]

    # --- LayerNorm 2 ---------------------------------------------------------
    mu2 = jnp.sum(y, axis=-1, keepdims=True) * inv_o
    ey2 = jnp.sum(y * y, axis=-1, keepdims=True) * inv_o
    var2 = jnp.maximum(ey2 - mu2 * mu2, 0.0)
    y = (y - mu2) * jax.lax.rsqrt(var2 + eps) * g2_ref[...] + be2_ref[...]

    o_ref[...] = y.reshape(gb, n_p, -1).astype(o_ref.dtype)


def gcn_model_forward(x, adj, params, *, graphs_per_block=None):
    """x: (B, N, Fin) f32, adj: (B, N, N) f32 symmetric-normalized adjacency."""
    B, N, Fin = x.shape
    H = params["w1"].shape[1]
    Fout = params["w2"].shape[1]

    f32, bf16 = jnp.float32, jnp.bfloat16

    # Lane-dense padding: node count and every feature width go to multiples of
    # 128 so all loads/stores are unmasked and MXU operands are lane-dense.
    # Kept at 128 (not 256) even on v6e/v7x: occupancy comes from batching
    # graph rows, not from padding feature dims with zeros.
    Np = _round_up(N, _LANE)
    Fp = _round_up(Fin, _LANE)
    Hp = _round_up(H, _LANE)
    Op = _round_up(Fout, _LANE)

    # Graphs per grid step: aim for >= 256 MXU rows per weight matmul, bounded
    # so the double-buffered bf16 adjacency block stays well under VMEM.
    if graphs_per_block is None:
        Gb = max(1, 256 // Np)
        while Gb > 1 and 2 * Gb * Np * Np * 2 > 24 * 1024 * 1024:
            Gb //= 2
    else:
        Gb = int(graphs_per_block)
    Gb = max(1, min(Gb, B))
    Bp = _round_up(B, Gb)

    def pad2(a, rows, cols):
        r0, c0 = a.shape
        return jnp.pad(a, ((0, rows - r0), (0, cols - c0)))

    # Zero padding keeps the result exact: padded adjacency rows/cols and
    # padded x rows/graphs contribute nothing to real rows; zero-padded columns
    # of W/b/gamma/beta keep padded output columns exactly 0; padded rows and
    # graphs are sliced off after the call.
    x_p = jnp.pad(x, ((0, Bp - B), (0, Np - N), (0, Fp - Fin))).astype(bf16)
    a_p = jnp.pad(adj, ((0, Bp - B), (0, Np - N), (0, Np - N))).astype(bf16)
    w1 = pad2(params["w1"], Fp, Hp).astype(bf16)
    w2 = pad2(params["w2"], Hp, Op).astype(bf16)
    b1 = pad2(params["b1"], 1, Hp).astype(f32)
    g1 = pad2(params["g1"], 1, Hp).astype(f32)
    be1 = pad2(params["be1"], 1, Hp).astype(f32)
    b2 = pad2(params["b2"], 1, Op).astype(f32)
    g2 = pad2(params["g2"], 1, Op).astype(f32)
    be2 = pad2(params["be2"], 1, Op).astype(f32)

    kernel = functools.partial(
        _gcn_kernel, h_dim=float(H), out_dim=float(Fout), ax_first=(Fin < H))

    full2d = lambda shape: pl.BlockSpec(shape, lambda g: (0, 0))

    grid_spec = pltpu.PrefetchScalarGridSpec(
        num_scalar_prefetch=0,
        grid=(Bp // Gb,),
        in_specs=[
            pl.BlockSpec((Gb, Np, Fp), lambda g: (g, 0, 0)),   # x (bf16)
            pl.BlockSpec((Gb, Np, Np), lambda g: (g, 0, 0)),   # adj (bf16)
            full2d((Fp, Hp)),                                  # w1
            full2d((1, Hp)),                                   # b1
            full2d((1, Hp)),                                   # gamma1
            full2d((1, Hp)),                                   # beta1
            full2d((Hp, Op)),                                  # w2
            full2d((1, Op)),                                   # b2
            full2d((1, Op)),                                   # gamma2
            full2d((1, Op)),                                   # beta2
        ],
        out_specs=pl.BlockSpec((Gb, Np, Op), lambda g: (g, 0, 0)),
    )

    # VMEM budget: double-buffered blocks + in-kernel f32 intermediates with
    # headroom, clamped to [32 MiB, 100 MiB] (v5e/v6e have 128 MiB physical;
    # for small shapes this stays at 32 MiB, which also fits v7x's 64 MiB).
    block_bytes = 2 * Gb * Np * (Np + Fp + Op) * 2          # adj + x + out (bf16)
    block_bytes += 2 * (Fp * Hp + Hp * Op) * 2              # weights (bf16)
    block_bytes += 2 * 6 * max(Hp, Op) * 4                  # bias / LN params
    block_bytes += Gb * Np * (Fp + 2 * Hp + 2 * Op) * 4     # f32 intermediates
    vmem_limit = int(min(100 * 2 ** 20, max(32 * 2 ** 20, block_bytes * 3 // 2)))

    out_p = pl.pallas_call(
        kernel,
        out_shape=jax.ShapeDtypeStruct((Bp, Np, Op), bf16),  # bf16 halves HBM writeback
        grid_spec=grid_spec,
        compiler_params=pltpu.CompilerParams(
            dimension_semantics=("parallel",),   # graph blocks are independent
            vmem_limit_bytes=vmem_limit),
    )(x_p, a_p, w1, b1, g1, be1, w2, b2, g2, be2)

    # TODO(synk): for very large N on v7x (64 MiB VMEM), panel-tile adjacency
    # rows (inner 'arbitrary' grid axis / pltpu.emit_pipeline) with h kept in a
    # VMEM scratch so a full (N, N) adjacency block is never resident.
    # TODO(synk): single-buffer the constant weight/LN operands
    # (pipeline_mode=pl.Buffered(1)) once that is plumbed through the TPU
    # pallas_call pipeliner; they are never re-fetched across the grid.
    return out_p[:B, :N, :Fout].astype(f32)


def normalized_adjacency(edge_index, num_nodes):
    """Dense D^-1/2 (A + I) D^-1/2 from a (2, E) int edge_index (PyG GCN norm)."""
    src, dst = edge_index[0], edge_index[1]
    A = jnp.zeros((num_nodes, num_nodes), jnp.float32)
    A = A.at[dst, src].set(1.0)                       # message src -> dst
    idx = jnp.arange(num_nodes)
    A = A.at[idx, idx].set(1.0)                       # add self loops
    deg = A.sum(axis=1)
    dinv = jnp.where(deg > 0, 1.0 / jnp.sqrt(deg), 0.0)
    return dinv[:, None] * A * dinv[None, :]


if __name__ == "__main__":
    # Small shapes consistent with the module: 2 graphs, 8 nodes each,
    # input_dim=16, hidden_dim=32, output_dim=16.
    B, N, Fin, H, Fout = 2, 8, 16, 32, 16

    key = jax.random.PRNGKey(0)
    kx, kw1, kw2 = jax.random.split(key, 3)

    # Node features (x_list stacked as a batch).
    x = jax.random.normal(kx, (B, N, Fin), jnp.float32)

    # Deterministic edge_index per graph: an undirected ring with a shift.
    def make_edges(shift):
        s = jnp.arange(N)
        d = (s + 1 + shift) % N
        src = jnp.concatenate([s, d])
        dst = jnp.concatenate([d, s])
        return jnp.stack([src, dst]).astype(jnp.int32)

    edge_index_list = [make_edges(0), make_edges(2)]
    adj = jnp.stack([normalized_adjacency(e, N) for e in edge_index_list])

    # Deterministic parameters (GCNConv linear weights/biases, LayerNorm affine).
    params = {
        "w1": jax.random.normal(kw1, (Fin, H), jnp.float32) * (1.0 / jnp.sqrt(Fin)),
        "b1": jnp.zeros((1, H), jnp.float32),
        "g1": jnp.ones((1, H), jnp.float32),
        "be1": jnp.zeros((1, H), jnp.float32),
        "w2": jax.random.normal(kw2, (H, Fout), jnp.float32) * (1.0 / jnp.sqrt(H)),
        "b2": jnp.zeros((1, Fout), jnp.float32),
        "g2": jnp.ones((1, Fout), jnp.float32),
        "be2": jnp.zeros((1, Fout), jnp.float32),
    }

    out = gcn_model_forward(x, adj, params)
    jax.block_until_ready(out)
    assert out.shape == (B, N, Fout)

    # Pure-JAX f32 reference (same module math, no Pallas).  Tolerance covers
    # the bf16 matmul operands / bf16 output used by the kernel.
    def ref_one(xg, ag):
        h = ag @ (xg @ params["w1"]) + params["b1"]
        h = jnp.maximum(h, 0.0)
        mu = h.mean(-1, keepdims=True); var = ((h - mu) ** 2).mean(-1, keepdims=True)
        h = (h - mu) / jnp.sqrt(var + 1e-5) * params["g1"] + params["be1"]
        y = ag @ (h @ params["w2"]) + params["b2"]
        mu = y.mean(-1, keepdims=True); var = ((y - mu) ** 2).mean(-1, keepdims=True)
        return (y - mu) / jnp.sqrt(var + 1e-5) * params["g2"] + params["be2"]

    ref = jnp.stack([ref_one(x[b], adj[b]) for b in range(B)])
    assert jnp.allclose(out, ref, atol=1e-1, rtol=1e-1), \
        float(jnp.max(jnp.abs(out - ref)))

    print("KERNEL_OK")
</pallas_src>

<mosaic_0001>
module attributes {stable_mosaic.version = 11 : i64} {
  func.func @_gcn_kernel(%arg0: i32, %arg1: memref<2x128x128xbf16, #tpu.memory_space<vmem>>, %arg2: memref<2x128x128xbf16, #tpu.memory_space<vmem>>, %arg3: memref<128x128xbf16, #tpu.memory_space<vmem>>, %arg4: memref<1x128xf32, #tpu.memory_space<vmem>>, %arg5: memref<1x128xf32, #tpu.memory_space<vmem>>, %arg6: memref<1x128xf32, #tpu.memory_space<vmem>>, %arg7: memref<128x128xbf16, #tpu.memory_space<vmem>>, %arg8: memref<1x128xf32, #tpu.memory_space<vmem>>, %arg9: memref<1x128xf32, #tpu.memory_space<vmem>>, %arg10: memref<1x128xf32, #tpu.memory_space<vmem>>, %arg11: memref<2x128x128xbf16, #tpu.memory_space<vmem>>) attributes {dimension_semantics = [#tpu.dimension_semantics<parallel>], iteration_bounds = array<i64: 1>, scalar_prefetch = 0 : i64, scratch_operands = 0 : i64, tpu.core_type = #tpu.core_type<tc>, window_params = [{transform_indices = @transform_0, window_bounds = array<i64: 2, 128, 128>}, {transform_indices = @transform_1, window_bounds = array<i64: 2, 128, 128>}, {pipeline_mode = #tpu.pipeline_mode<synchronous>, transform_indices = @transform_2, window_bounds = array<i64: 128, 128>}, {pipeline_mode = #tpu.pipeline_mode<synchronous>, transform_indices = @transform_3, window_bounds = array<i64: 1, 128>}, {pipeline_mode = #tpu.pipeline_mode<synchronous>, transform_indices = @transform_4, window_bounds = array<i64: 1, 128>}, {pipeline_mode = #tpu.pipeline_mode<synchronous>, transform_indices = @transform_5, window_bounds = array<i64: 1, 128>}, {pipeline_mode = #tpu.pipeline_mode<synchronous>, transform_indices = @transform_6, window_bounds = array<i64: 128, 128>}, {pipeline_mode = #tpu.pipeline_mode<synchronous>, transform_indices = @transform_7, window_bounds = array<i64: 1, 128>}, {pipeline_mode = #tpu.pipeline_mode<synchronous>, transform_indices = @transform_8, window_bounds = array<i64: 1, 128>}, {pipeline_mode = #tpu.pipeline_mode<synchronous>, transform_indices = @transform_9, window_bounds = array<i64: 1, 128>}, {transform_indices = @transform_10, window_bounds = array<i64: 2, 128, 128>}]} {
    %c0 = arith.constant 0 : index
    %c0_0 = arith.constant 0 : index
    %c0_1 = arith.constant 0 : index
    %0 = vector.load %arg2[%c0, %c0_0, %c0_1] : memref<2x128x128xbf16, #tpu.memory_space<vmem>>, vector<2x128x128xbf16>
    %c0_2 = arith.constant 0 : index
    %c0_3 = arith.constant 0 : index
    %c0_4 = arith.constant 0 : index
    %1 = vector.load %arg1[%c0_2, %c0_3, %c0_4] : memref<2x128x128xbf16, #tpu.memory_space<vmem>>, vector<2x128x128xbf16>
    "tpu.trace_start"() <{level = 10 : i32, message = "gij,gjf->gif"}> : () -> ()
    %cst = arith.constant dense<0.000000e+00> : vector<2x128x128xf32>
    %2 = tpu.matmul %0, %1, %cst {dimension_numbers = #tpu.dot_dimension_numbers<[2], [1], [1], [2], [0, 0, 0, 1, 1, 2], [0], [0]>} : vector<2x128x128xbf16>, vector<2x128x128xbf16>, vector<2x128x128xf32> -> vector<2x128x128xf32>
    "tpu.trace_stop"() : () -> ()
    %3 = vector.shape_cast %2 : vector<2x128x128xf32> to vector<256x128xf32>
    %4 = arith.truncf %3 : vector<256x128xf32> to vector<256x128xbf16>
    %c0_5 = arith.constant 0 : index
    %c0_6 = arith.constant 0 : index
    %5 = vector.load %arg3[%c0_5, %c0_6] : memref<128x128xbf16, #tpu.memory_space<vmem>>, vector<128x128xbf16>
    %cst_7 = arith.constant dense<0.000000e+00> : vector<256x128xf32>
    %6 = tpu.matmul %4, %5, %cst_7 {dimension_numbers = #tpu.dot_dimension_numbers<[1], [0], [0], [1], [0, 0, 1, 1], [], []>} : vector<256x128xbf16>, vector<128x128xbf16>, vector<256x128xf32> -> vector<256x128xf32>
    %c0_8 = arith.constant 0 : index
    %c0_9 = arith.constant 0 : index
    %7 = vector.load %arg4[%c0_8, %c0_9] : memref<1x128xf32, #tpu.memory_space<vmem>>, vector<1x128xf32>
    %8 = vector.broadcast %7 : vector<1x128xf32> to vector<256x128xf32>
    %9 = arith.addf %6, %8 : vector<256x128xf32>
    %cst_10 = arith.constant 0.000000e+00 : f32
    %10 = vector.broadcast %cst_10 : f32 to vector<256x128xf32>
    %11 = arith.maximumf %9, %10 : vector<256x128xf32>
    %cst_11 = arith.constant dense<0.000000e+00> : vector<256xf32>
    %12 = vector.multi_reduction <add>, %11, %cst_11 [1] : vector<256x128xf32> to vector<256xf32>
    %13 = vector.shape_cast %12 : vector<256xf32> to vector<256x1xf32>
    %cst_12 = arith.constant 3.125000e-02 : f32
    %14 = vector.broadcast %cst_12 : f32 to vector<256x1xf32>
    %15 = arith.mulf %13, %14 : vector<256x1xf32>
    %16 = arith.mulf %11, %11 : vector<256x128xf32>
    %cst_13 = arith.constant dense<0.000000e+00> : vector<256xf32>
    %17 = vector.multi_reduction <add>, %16, %cst_13 [1] : vector<256x128xf32> to vector<256xf32>
    %18 = vector.shape_cast %17 : vector<256xf32> to vector<256x1xf32>
    %cst_14 = arith.constant 3.125000e-02 : f32
    %19 = vector.broadcast %cst_14 : f32 to vector<256x1xf32>
    %20 = arith.mulf %18, %19 : vector<256x1xf32>
    %21 = arith.mulf %15, %15 : vector<256x1xf32>
    %22 = arith.subf %20, %21 : vector<256x1xf32>
    %cst_15 = arith.constant 0.000000e+00 : f32
    %23 = vector.broadcast %cst_15 : f32 to vector<256x1xf32>
    %24 = arith.maximumf %22, %23 : vector<256x1xf32>
    %25 = vector.broadcast %15 : vector<256x1xf32> to vector<256x128xf32>
    %26 = arith.subf %11, %25 : vector<256x128xf32>
    %cst_16 = arith.constant 9.99999974E-6 : f32
    %27 = vector.broadcast %cst_16 : f32 to vector<256x1xf32>
    %28 = arith.addf %24, %27 : vector<256x1xf32>
    %29 = math.rsqrt %28 : vector<256x1xf32>
    %30 = vector.broadcast %29 : vector<256x1xf32> to vector<256x128xf32>
    %31 = arith.mulf %26, %30 : vector<256x128xf32>
    %c0_17 = arith.constant 0 : index
    %c0_18 = arith.constant 0 : index
    %32 = vector.load %arg5[%c0_17, %c0_18] : memref<1x128xf32, #tpu.memory_space<vmem>>, vector<1x128xf32>
    %33 = vector.broadcast %32 : vector<1x128xf32> to vector<256x128xf32>
    %34 = arith.mulf %31, %33 : vector<256x128xf32>
    %c0_19 = arith.constant 0 : index
    %c0_20 = arith.constant 0 : index
    %35 = vector.load %arg6[%c0_19, %c0_20] : memref<1x128xf32, #tpu.memory_space<vmem>>, vector<1x128xf32>
    %36 = vector.broadcast %35 : vector<1x128xf32> to vector<256x128xf32>
    %37 = arith.addf %34, %36 : vector<256x128xf32>
    %38 = arith.truncf %37 : vector<256x128xf32> to vector<256x128xbf16>
    %c0_21 = arith.constant 0 : index
    %c0_22 = arith.constant 0 : index
    %39 = vector.load %arg7[%c0_21, %c0_22] : memref<128x128xbf16, #tpu.memory_space<vmem>>, vector<128x128xbf16>
    %cst_23 = arith.constant dense<0.000000e+00> : vector<256x128xf32>
    %40 = tpu.matmul %38, %39, %cst_23 {dimension_numbers = #tpu.dot_dimension_numbers<[1], [0], [0], [1], [0, 0, 1, 1], [], []>} : vector<256x128xbf16>, vector<128x128xbf16>, vector<256x128xf32> -> vector<256x128xf32>
    %41 = vector.shape_cast %40 : vector<256x128xf32> to vector<2x128x128xf32>
    %42 = arith.truncf %41 : vector<2x128x128xf32> to vector<2x128x128xbf16>
    "tpu.trace_start"() <{level = 10 : i32, message = "gij,gjf->gif"}> : () -> ()
    %cst_24 = arith.constant dense<0.000000e+00> : vector<2x128x128xf32>
    %43 = tpu.matmul %0, %42, %cst_24 {dimension_numbers = #tpu.dot_dimension_numbers<[2], [1], [1], [2], [0, 0, 0, 1, 1, 2], [0], [0]>} : vector<2x128x128xbf16>, vector<2x128x128xbf16>, vector<2x128x128xf32> -> vector<2x128x128xf32>
    "tpu.trace_stop"() : () -> ()
    %44 = vector.shape_cast %43 : vector<2x128x128xf32> to vector<256x128xf32>
    %c0_25 = arith.constant 0 : index
    %c0_26 = arith.constant 0 : index
    %45 = vector.load %arg8[%c0_25, %c0_26] : memref<1x128xf32, #tpu.memory_space<vmem>>, vector<1x128xf32>
    %46 = vector.broadcast %45 : vector<1x128xf32> to vector<256x128xf32>
    %47 = arith.addf %44, %46 : vector<256x128xf32>
    %cst_27 = arith.constant dense<0.000000e+00> : vector<256xf32>
    %48 = vector.multi_reduction <add>, %47, %cst_27 [1] : vector<256x128xf32> to vector<256xf32>
    %49 = vector.shape_cast %48 : vector<256xf32> to vector<256x1xf32>
    %cst_28 = arith.constant 6.250000e-02 : f32
    %50 = vector.broadcast %cst_28 : f32 to vector<256x1xf32>
    %51 = arith.mulf %49, %50 : vector<256x1xf32>
    %52 = arith.mulf %47, %47 : vector<256x128xf32>
    %cst_29 = arith.constant dense<0.000000e+00> : vector<256xf32>
    %53 = vector.multi_reduction <add>, %52, %cst_29 [1] : vector<256x128xf32> to vector<256xf32>
    %54 = vector.shape_cast %53 : vector<256xf32> to vector<256x1xf32>
    %cst_30 = arith.constant 6.250000e-02 : f32
    %55 = vector.broadcast %cst_30 : f32 to vector<256x1xf32>
    %56 = arith.mulf %54, %55 : vector<256x1xf32>
    %57 = arith.mulf %51, %51 : vector<256x1xf32>
    %58 = arith.subf %56, %57 : vector<256x1xf32>
    %cst_31 = arith.constant 0.000000e+00 : f32
    %59 = vector.broadcast %cst_31 : f32 to vector<256x1xf32>
    %60 = arith.maximumf %58, %59 : vector<256x1xf32>
    %61 = vector.broadcast %51 : vector<256x1xf32> to vector<256x128xf32>
    %62 = arith.subf %47, %61 : vector<256x128xf32>
    %cst_32 = arith.constant 9.99999974E-6 : f32
    %63 = vector.broadcast %cst_32 : f32 to vector<256x1xf32>
    %64 = arith.addf %60, %63 : vector<256x1xf32>
    %65 = math.rsqrt %64 : vector<256x1xf32>
    %66 = vector.broadcast %65 : vector<256x1xf32> to vector<256x128xf32>
    %67 = arith.mulf %62, %66 : vector<256x128xf32>
    %c0_33 = arith.constant 0 : index
    %c0_34 = arith.constant 0 : index
    %68 = vector.load %arg9[%c0_33, %c0_34] : memref<1x128xf32, #tpu.memory_space<vmem>>, vector<1x128xf32>
    %69 = vector.broadcast %68 : vector<1x128xf32> to vector<256x128xf32>
    %70 = arith.mulf %67, %69 : vector<256x128xf32>
    %c0_35 = arith.constant 0 : index
    %c0_36 = arith.constant 0 : index
    %71 = vector.load %arg10[%c0_35, %c0_36] : memref<1x128xf32, #tpu.memory_space<vmem>>, vector<1x128xf32>
    %72 = vector.broadcast %71 : vector<1x128xf32> to vector<256x128xf32>
    %73 = arith.addf %70, %72 : vector<256x128xf32>
    %74 = vector.shape_cast %73 : vector<256x128xf32> to vector<2x128x128xf32>
    %75 = arith.truncf %74 : vector<2x128x128xf32> to vector<2x128x128xbf16>
    %c0_37 = arith.constant 0 : index
    %c0_38 = arith.constant 0 : index
    %c0_39 = arith.constant 0 : index
    %76 = vector.load %arg11[%c0_37, %c0_38, %c0_39] : memref<2x128x128xbf16, #tpu.memory_space<vmem>>, vector<2x128x128xbf16>
    tpu.vector_store %arg11[%c0_37, %c0_38, %c0_39], %75 {strides = array<i32>} : memref<2x128x128xbf16, #tpu.memory_space<vmem>>, vector<2x128x128xbf16>,
    return
  }
  func.func @transform_0(%arg0: i32) -> (i32, i32, i32) {
    %c0_i32 = arith.constant 0 : i32
    %c0_i32_0 = arith.constant 0 : i32
    %c0_i32_1 = arith.constant 0 : i32
    return %arg0, %c0_i32, %c0_i32_0 : i32, i32, i32
  }
  func.func @transform_1(%arg0: i32) -> (i32, i32, i32) {
    %c0_i32 = arith.constant 0 : i32
    %c0_i32_0 = arith.constant 0 : i32
    %c0_i32_1 = arith.constant 0 : i32
    return %arg0, %c0_i32, %c0_i32_0 : i32, i32, i32
  }
  func.func @transform_2(%arg0: i32) -> (i32, i32) {
    %c0_i32 = arith.constant 0 : i32
    %c0_i32_0 = arith.constant 0 : i32
    %c0_i32_1 = arith.constant 0 : i32
    return %c0_i32, %c0_i32_0 : i32, i32
  }
  func.func @transform_3(%arg0: i32) -> (i32, i32) {
    %c0_i32 = arith.constant 0 : i32
    %c0_i32_0 = arith.constant 0 : i32
    %c0_i32_1 = arith.constant 0 : i32
    return %c0_i32, %c0_i32_0 : i32, i32
  }
  func.func @transform_4(%arg0: i32) -> (i32, i32) {
    %c0_i32 = arith.constant 0 : i32
    %c0_i32_0 = arith.constant 0 : i32
    %c0_i32_1 = arith.constant 0 : i32
    return %c0_i32, %c0_i32_0 : i32, i32
  }
  func.func @transform_5(%arg0: i32) -> (i32, i32) {
    %c0_i32 = arith.constant 0 : i32
    %c0_i32_0 = arith.constant 0 : i32
    %c0_i32_1 = arith.constant 0 : i32
    return %c0_i32, %c0_i32_0 : i32, i32
  }
  func.func @transform_6(%arg0: i32) -> (i32, i32) {
    %c0_i32 = arith.constant 0 : i32
    %c0_i32_0 = arith.constant 0 : i32
    %c0_i32_1 = arith.constant 0 : i32
    return %c0_i32, %c0_i32_0 : i32, i32
  }
  func.func @transform_7(%arg0: i32) -> (i32, i32) {
    %c0_i32 = arith.constant 0 : i32
    %c0_i32_0 = arith.constant 0 : i32
    %c0_i32_1 = arith.constant 0 : i32
    return %c0_i32, %c0_i32_0 : i32, i32
  }
  func.func @transform_8(%arg0: i32) -> (i32, i32) {
    %c0_i32 = arith.constant 0 : i32
    %c0_i32_0 = arith.constant 0 : i32
    %c0_i32_1 = arith.constant 0 : i32
    return %c0_i32, %c0_i32_0 : i32, i32
  }
  func.func @transform_9(%arg0: i32) -> (i32, i32) {
    %c0_i32 = arith.constant 0 : i32
    %c0_i32_0 = arith.constant 0 : i32
    %c0_i32_1 = arith.constant 0 : i32
    return %c0_i32, %c0_i32_0 : i32, i32
  }
  func.func @transform_10(%arg0: i32) -> (i32, i32, i32) {
    %c0_i32 = arith.constant 0 : i32
    %c0_i32_0 = arith.constant 0 : i32
    %c0_i32_1 = arith.constant 0 : i32
    return %arg0, %c0_i32, %c0_i32_0 : i32, i32, i32
  }
}

</mosaic_0001>

<llo_original>
// kernel: tpu_custom_call.1
$region0: #{tpu_custom_call.1}
  #allocation0 [shape = 'u32[]', space=smem, size = 0x4, offset = 0x4, fixed_abs, tag = 'smem constant byte address 0x4 - core index']
  #allocation1 [shape = 'u32[72,128]{1,0:T(1,128)}', space=vmem, size = 0x9000, scoped, tag = 'internal scratch']
  %s0 = inlined_call_operand.hbm [shape: bf16[2,128,128], index: 0, kind: input, shape index: {}]
  %s1 = inlined_call_operand.hbm [shape: bf16[2,128,128], index: 1, kind: input, shape index: {}]
  %s2 = inlined_call_operand.hbm [shape: bf16[128,128], index: 2, kind: input, shape index: {}]
  %s3 = inlined_call_operand.vmem [shape: f32[1,128], index: 3, kind: input, shape index: {}]
  %s4 = inlined_call_operand.vmem [shape: f32[1,128], index: 4, kind: input, shape index: {}]
  %s5 = inlined_call_operand.vmem [shape: f32[1,128], index: 5, kind: input, shape index: {}]
  %s6 = inlined_call_operand.hbm [shape: bf16[128,128], index: 6, kind: input, shape index: {}]
  %s7 = inlined_call_operand.vmem [shape: f32[1,128], index: 7, kind: input, shape index: {}]
  %s8 = inlined_call_operand.vmem [shape: f32[1,128], index: 8, kind: input, shape index: {}]
  %s9 = inlined_call_operand.vmem [shape: f32[1,128], index: 9, kind: input, shape index: {}]
  %s10 = inlined_call_operand.hbm [shape: bf16[2,128,128], index: 10, kind: output, shape index: {}]
  %s11 = sld [smem:[#allocation0]]
  $region66: #{tpu_custom_call.1} parent=0
    _
  %s13 = ssub.s32 1, %s11
  %s14 = scalar_select 0, %s13, %s11
  $region1: #{tpu_custom_call.1} parent=0
    #allocation2 [shape = 'u8[65536]{0}', space=vmem, size = 0x10000, scoped, tag = 'input window, operand 0, single buffered']
    #allocation3 [shape = 's32[1]{0}', space=sflag, size = 0x4, scoped, tag = 'scoped memory for tpu_custom_call.1']
    #allocation4 [shape = 's32[1]{0}', space=sflag, size = 0x4, scoped, tag = 'scoped memory for tpu_custom_call.1']
    #allocation5 [shape = 'u8[65536]{0}', space=vmem, size = 0x10000, scoped, tag = 'input window, operand 1, single buffered']
    #allocation6 [shape = 's32[1]{0}', space=sflag, size = 0x4, scoped, tag = 'scoped memory for tpu_custom_call.1']
    #allocation7 [shape = 'u8[32768]{0}', space=vmem, size = 0x8000, scoped, tag = 'input window, operand 2, single buffered']
    #allocation8 [shape = 'u8[32768]{0}', space=vmem, size = 0x8000, scoped, tag = 'input window, operand 6, single buffered']
    #allocation9 [shape = 's32[1]{0}', space=sflag, size = 0x4, scoped, tag = 'scoped memory for tpu_custom_call.1']
    #allocation10 [shape = 'u8[65536]{0}', space=vmem, size = 0x10000, scoped, tag = 'output window, operand 0, single buffered']
    %15 = vsyncpa [#allocation3], 0
    %16 = vsyncpa [#allocation6], 0
    %17 = vsyncpa [#allocation9], 0
    %18 = vsyncpa [#allocation4], 0
    // Predicated region
    $region2: #{tpu_custom_call.1} parent=1 // pred_check
      _
    $region3: #{tpu_custom_call.1} parent=1 // pred_check_branch
      %20 = sbr.rel (0) target = $region5
    $region4: #{tpu_custom_call.1} parent=1 // pred_region
      %22 = vsyncadd [#allocation3], 0
      %s23 = sshll.u32 %s0, 4
      %s24 = int_to_ptr.hbm [resolvable:$true] %s23
      %s25 = sshll.u32 [#allocation2], 4
      %s26 = int_to_ptr.vmem [resolvable:$true] %s25
      %31 = dma.hbm_to_vmem [thread:$0]  %s24, 2048, %s26, [#allocation3], 64, 64, 4
    $region5: #{tpu_custom_call.1} parent=1 // pred_fallthru
      _
    // Predicated region
    $region6: #{tpu_custom_call.1} parent=1 // pred_check
      _
    $region7: #{tpu_custom_call.1} parent=1 // pred_check_branch
      %33 = sbr.rel (0) target = $region9
    $region8: #{tpu_custom_call.1} parent=1 // pred_region
      %35 = vsyncadd [#allocation6], 0
      %s36 = sshll.u32 %s1, 4
      %s37 = int_to_ptr.hbm [resolvable:$true] %s36
      %s38 = sshll.u32 [#allocation5], 4
      %s39 = int_to_ptr.vmem [resolvable:$true] %s38
      %44 = dma.hbm_to_vmem [thread:$0]  %s37, 2048, %s39, [#allocation6], 64, 64, 4
    $region9: #{tpu_custom_call.1} parent=1 // pred_fallthru
      _
    // Predicated region
    $region10: #{tpu_custom_call.1} parent=1 // pred_check
      _
    $region11: #{tpu_custom_call.1} parent=1 // pred_check_branch
      %46 = sbr.rel (0) target = $region13
    $region12: #{tpu_custom_call.1} parent=1 // pred_region
      %48 = vsyncadd [#allocation6], 0
      %s49 = sshll.u32 %s2, 4
      %s50 = int_to_ptr.hbm [resolvable:$true] %s49
      %s51 = sshll.u32 [#allocation7], 4
      %s52 = int_to_ptr.vmem [resolvable:$true] %s51
      %57 = dma.hbm_to_vmem [thread:$0]  %s50, 1024, %s52, [#allocation6], 64, 64, 4
    $region13: #{tpu_custom_call.1} parent=1 // pred_fallthru
      _
    // Predicated region
    $region14: #{tpu_custom_call.1} parent=1 // pred_check
      _
    $region15: #{tpu_custom_call.1} parent=1 // pred_check_branch
      %59 = sbr.rel (0) target = $region17
    $region16: #{tpu_custom_call.1} parent=1 // pred_region
      _
    $region17: #{tpu_custom_call.1} parent=1 // pred_fallthru
      _
    // Predicated region
    $region18: #{tpu_custom_call.1} parent=1 // pred_check
      _
    $region19: #{tpu_custom_call.1} parent=1 // pred_check_branch
      %61 = sbr.rel (0) target = $region21
    $region20: #{tpu_custom_call.1} parent=1 // pred_region
      _
    $region21: #{tpu_custom_call.1} parent=1 // pred_fallthru
      _
    // Predicated region
    $region22: #{tpu_custom_call.1} parent=1 // pred_check
      _
    $region23: #{tpu_custom_call.1} parent=1 // pred_check_branch
      %63 = sbr.rel (0) target = $region25
    $region24: #{tpu_custom_call.1} parent=1 // pred_region
      _
    $region25: #{tpu_custom_call.1} parent=1 // pred_fallthru
      _
    // Predicated region
    $region26: #{tpu_custom_call.1} parent=1 // pred_check
      _
    $region27: #{tpu_custom_call.1} parent=1 // pred_check_branch
      %65 = sbr.rel (0) target = $region29
    $region28: #{tpu_custom_call.1} parent=1 // pred_region
      %67 = vsyncadd [#allocation9], 0
      %s68 = sshll.u32 %s6, 4
      %s69 = int_to_ptr.hbm [resolvable:$true] %s68
      %s70 = sshll.u32 [#allocation8], 4
      %s71 = int_to_ptr.vmem [resolvable:$true] %s70
      %76 = dma.hbm_to_vmem [thread:$0]  %s69, 1024, %s71, [#allocation9], 64, 64, 4
    $region29: #{tpu_custom_call.1} parent=1 // pred_fallthru
      _
    // Predicated region
    $region30: #{tpu_custom_call.1} parent=1 // pred_check
      _
    $region31: #{tpu_custom_call.1} parent=1 // pred_check_branch
      %78 = sbr.rel (0) target = $region33
    $region32: #{tpu_custom_call.1} parent=1 // pred_region
      _
    $region33: #{tpu_custom_call.1} parent=1 // pred_fallthru
      _
    // Predicated region
    $region34: #{tpu_custom_call.1} parent=1 // pred_check
      _
    $region35: #{tpu_custom_call.1} parent=1 // pred_check_branch
      %80 = sbr.rel (0) target = $region37
    $region36: #{tpu_custom_call.1} parent=1 // pred_region
      _
    $region37: #{tpu_custom_call.1} parent=1 // pred_fallthru
      _
    // Predicated region
    $region38: #{tpu_custom_call.1} parent=1 // pred_check
      _
    $region39: #{tpu_custom_call.1} parent=1 // pred_check_branch
      %82 = sbr.rel (0) target = $region41
    $region40: #{tpu_custom_call.1} parent=1 // pred_region
      _
    $region41: #{tpu_custom_call.1} parent=1 // pred_fallthru
      _
    // Predicated region
    $region42: #{tpu_custom_call.1} parent=1 // pred_check
      _
    $region43: #{tpu_custom_call.1} parent=1 // pred_check_branch
      %84 = sbr.rel (0) target = $region45
    $region44: #{tpu_custom_call.1} parent=1 // pred_region
      %86 = dma.done [#allocation3], 2048
    $region45: #{tpu_custom_call.1} parent=1 // pred_fallthru
      _
    // Predicated region
    $region46: #{tpu_custom_call.1} parent=1 // pred_check
      _
    $region47: #{tpu_custom_call.1} parent=1 // pred_check_branch
      %88 = sbr.rel (0) target = $region49
    $region48: #{tpu_custom_call.1} parent=1 // pred_region
      %90 = dma.done [#allocation6], 2048
    $region49: #{tpu_custom_call.1} parent=1 // pred_fallthru
      _
    // Predicated region
    $region50: #{tpu_custom_call.1} parent=1 // pred_check
      _
    $region51: #{tpu_custom_call.1} parent=1 // pred_check_branch
      %92 = sbr.rel (0) target = $region53
    $region52: #{tpu_custom_call.1} parent=1 // pred_region
      %94 = dma.done [#allocation6], 1024
    $region53: #{tpu_custom_call.1} parent=1 // pred_fallthru
      _
    // Predicated region
    $region54: #{tpu_custom_call.1} parent=1 // pred_check
      _
    $region55: #{tpu_custom_call.1} parent=1 // pred_check_branch
      %96 = sbr.rel (0) target = $region57
    $region56: #{tpu_custom_call.1} parent=1 // pred_region
      %98 = dma.done [#allocation9], 1024
    $region57: #{tpu_custom_call.1} parent=1 // pred_fallthru
      _
    %v99 = vld [vmem:[#allocation5] sm:$0xf]
    %v100 = vld [vmem:[#allocation5 + $0x4] sm:$0xf]
    %v101 = vld [vmem:[#allocation5 + $0x8] sm:$0xf]
    %v102 = vld [vmem:[#allocation5 + $0xc] sm:$0xf]
    %v103 = vld [vmem:[#allocation5 + $0x10] sm:$0xf]
    %v104 = vld [vmem:[#allocation5 + $0x14] sm:$0xf]
    %v105 = vld [vmem:[#allocation5 + $0x18] sm:$0xf]
    %v106 = vld [vmem:[#allocation5 + $0x1c] sm:$0xf]
    %v107 = vld [vmem:[#allocation5 + $0x20] sm:$0xf]
    %v108 = vld [vmem:[#allocation5 + $0x24] sm:$0xf]
    %v109 = vld [vmem:[#allocation5 + $0x28] sm:$0xf]
    %v110 = vld [vmem:[#allocation5 + $0x2c] sm:$0xf]
    %v111 = vld [vmem:[#allocation5 + $0x30] sm:$0xf]
    %v112 = vld [vmem:[#allocation5 + $0x34] sm:$0xf]
    %v113 = vld [vmem:[#allocation5 + $0x38] sm:$0xf]
    %v114 = vld [vmem:[#allocation5 + $0x3c] sm:$0xf]
    %v115 = vld [vmem:[#allocation5 + $0x40] sm:$0xf]
    %v116 = vld [vmem:[#allocation5 + $0x44] sm:$0xf]
    %v117 = vld [vmem:[#allocation5 + $0x48] sm:$0xf]
    %v118 = vld [vmem:[#allocation5 + $0x4c] sm:$0xf]
    %v119 = vld [vmem:[#allocation5 + $0x50] sm:$0xf]
    %v120 = vld [vmem:[#allocation5 + $0x54] sm:$0xf]
    %v121 = vld [vmem:[#allocation5 + $0x58] sm:$0xf]
    %v122 = vld [vmem:[#allocation5 + $0x5c] sm:$0xf]
    %v123 = vld [vmem:[#allocation5 + $0x60] sm:$0xf]
    %v124 = vld [vmem:[#allocation5 + $0x64] sm:$0xf]
    %v125 = vld [vmem:[#allocation5 + $0x68] sm:$0xf]
    %v126 = vld [vmem:[#allocation5 + $0x6c] sm:$0xf]
    %v127 = vld [vmem:[#allocation5 + $0x70] sm:$0xf]
    %v128 = vld [vmem:[#allocation5 + $0x74] sm:$0xf]
    %v129 = vld [vmem:[#allocation5 + $0x78] sm:$0xf]
    %v130 = vld [vmem:[#allocation5 + $0x7c] sm:$0xf]
    %v131 = vld [vmem:[#allocation2] sm:$0xf]
    %v132 = vld [vmem:[#allocation2 + $0x4] sm:$0xf]
    %v133 = vld [vmem:[#allocation2 + $0x8] sm:$0xf]
    %v134 = vld [vmem:[#allocation2 + $0xc] sm:$0xf]
    %v135 = vld [vmem:[#allocation2 + $0x10] sm:$0xf]
    %v136 = vld [vmem:[#allocation2 + $0x14] sm:$0xf]
    %v137 = vld [vmem:[#allocation2 + $0x18] sm:$0xf]
    %v138 = vld [vmem:[#allocation2 + $0x1c] sm:$0xf]
    %v139 = vld [vmem:[#allocation2 + $0x20] sm:$0xf]
    %v140 = vld [vmem:[#allocation2 + $0x24] sm:$0xf]
    %v141 = vld [vmem:[#allocation2 + $0x28] sm:$0xf]
    %v142 = vld [vmem:[#allocation2 + $0x2c] sm:$0xf]
    %v143 = vld [vmem:[#allocation2 + $0x30] sm:$0xf]
    %v144 = vld [vmem:[#allocation2 + $0x34] sm:$0xf]
    %v145 = vld [vmem:[#allocation2 + $0x38] sm:$0xf]
    %v146 = vld [vmem:[#allocation2 + $0x3c] sm:$0xf]
    %v147 = vld [vmem:[#allocation2 + $0x40] sm:$0xf]
    %v148 = vld [vmem:[#allocation2 + $0x44] sm:$0xf]
    %v149 = vld [vmem:[#allocation2 + $0x48] sm:$0xf]
    %v150 = vld [vmem:[#allocation2 + $0x4c] sm:$0xf]
    %v151 = vld [vmem:[#allocation2 + $0x50] sm:$0xf]
    %v152 = vld [vmem:[#allocation2 + $0x54] sm:$0xf]
    %v153 = vld [vmem:[#allocation2 + $0x58] sm:$0xf]
    %v154 = vld [vmem:[#allocation2 + $0x5c] sm:$0xf]
    %v155 = vld [vmem:[#allocation2 + $0x60] sm:$0xf]
    %v156 = vld [vmem:[#allocation2 + $0x64] sm:$0xf]
    %v157 = vld [vmem:[#allocation2 + $0x68] sm:$0xf]
    %v158 = vld [vmem:[#allocation2 + $0x6c] sm:$0xf]
    %v159 = vld [vmem:[#allocation2 + $0x70] sm:$0xf]
    %v160 = vld [vmem:[#allocation2 + $0x74] sm:$0xf]
    %v161 = vld [vmem:[#allocation2 + $0x78] sm:$0xf]
    %v162 = vld [vmem:[#allocation2 + $0x7c] sm:$0xf]
    %v179 = vunpack.c.l.b16 %v99
    %v180 = vunpack.c.l.b16 %v100
    %v181 = vunpack.c.l.b16 %v101
    %v182 = vunpack.c.l.b16 %v102
    %v183 = vunpack.c.l.b16 %v103
    %v184 = vunpack.c.l.b16 %v104
    %v185 = vunpack.c.l.b16 %v105
    %v186 = vunpack.c.l.b16 %v106
    %v187 = vunpack.c.l.b16 %v107
    %v188 = vunpack.c.l.b16 %v108
    %v189 = vunpack.c.l.b16 %v109
    %v190 = vunpack.c.l.b16 %v110
    %v191 = vunpack.c.l.b16 %v111
    %v192 = vunpack.c.l.b16 %v112
    %v193 = vunpack.c.l.b16 %v113
    %v194 = vunpack.c.l.b16 %v114
    %v195 = vpack.c.b16 %v180, %v179
    %v196 = vpack.c.b16 %v182, %v181
    %v197 = vpack.c.b16 %v184, %v183
    %v198 = vpack.c.b16 %v186, %v185
    %v199 = vpack.c.b16 %v188, %v187
    %v200 = vpack.c.b16 %v190, %v189
    %v201 = vpack.c.b16 %v192, %v191
    %v202 = vpack.c.b16 %v194, %v193
    %v227 = vunpack.c.l.b16 %v131
    %v228 = vunpack.c.l.b16 %v132
    %v229 = vunpack.c.l.b16 %v133
    %v230 = vunpack.c.l.b16 %v134
    %v231 = vunpack.c.l.b16 %v135
    %v232 = vunpack.c.l.b16 %v136
    %v233 = vunpack.c.l.b16 %v137
    %v234 = vunpack.c.l.b16 %v138
    %v235 = vunpack.c.l.b16 %v139
    %v236 = vunpack.c.l.b16 %v140
    %v237 = vunpack.c.l.b16 %v141
    %v238 = vunpack.c.l.b16 %v142
    %v239 = vunpack.c.l.b16 %v143
    %v240 = vunpack.c.l.b16 %v144
    %v241 = vunpack.c.l.b16 %v145
    %v242 = vunpack.c.l.b16 %v146
    %v243 = vpack.c.b16 %v228, %v227
    %v244 = vpack.c.b16 %v230, %v229
    %v245 = vpack.c.b16 %v232, %v231
    %v246 = vpack.c.b16 %v234, %v233
    %v247 = vpack.c.b16 %v236, %v235
    %v248 = vpack.c.b16 %v238, %v237
    %v249 = vpack.c.b16 %v240, %v239
    %v250 = vpack.c.b16 %v242, %v241
    %259 = vmatpush.bf16.msra.mxu0 %v250
    %260 = vmatpush.bf16.msra.mxu0 %v249
    %261 = vmatpush.bf16.msra.mxu0 %v248
    %262 = vmatpush.bf16.msra.mxu0 %v247
    %263 = vmatpush.bf16.msra.mxu0 %v246
    %264 = vmatpush.bf16.msra.mxu0 %v245
    %265 = vmatpush.bf16.msra.mxu0 %v244
    %266 = vmatpush.bf16.msra.mxu0 %v243
    %267 = vmatmul.bf16.gmra.mxu0 %v195
    %v268 = vpop.f32.mrf.mxu0
    %v269 = vadd.f32 0.0, %v268
    %v270 = vpop.f32.mrf.mxu0
    %v271 = vadd.f32 0.0, %v270
    %272 = vmatmul.bf16.gmra.mxu0 %v196
    %v273 = vpop.f32.mrf.mxu0
    %v274 = vadd.f32 0.0, %v273
    %v275 = vpop.f32.mrf.mxu0
    %v276 = vadd.f32 0.0, %v275
    %277 = vmatmul.bf16.gmra.mxu0 %v197
    %v278 = vpop.f32.mrf.mxu0
    %v279 = vadd.f32 0.0, %v278
    %v280 = vpop.f32.mrf.mxu0
    %v281 = vadd.f32 0.0, %v280
    %282 = vmatmul.bf16.gmra.mxu0 %v198
    %v283 = vpop.f32.mrf.mxu0
    %v284 = vadd.f32 0.0, %v283
    %v285 = vpop.f32.mrf.mxu0
    %v286 = vadd.f32 0.0, %v285
    %287 = vmatmul.bf16.gmra.mxu0 %v199
    %v288 = vpop.f32.mrf.mxu0
    %v289 = vadd.f32 0.0, %v288
    %v290 = vpop.f32.mrf.mxu0
    %v291 = vadd.f32 0.0, %v290
    %292 = vmatmul.bf16.gmra.mxu0 %v200
    %v293 = vpop.f32.mrf.mxu0
    %v294 = vadd.f32 0.0, %v293
    %v295 = vpop.f32.mrf.mxu0
    %v296 = vadd.f32 0.0, %v295
    %297 = vmatmul.bf16.gmra.mxu0 %v201
    %v298 = vpop.f32.mrf.mxu0
    %v299 = vadd.f32 0.0, %v298
    %v300 = vpop.f32.mrf.mxu0
    %v301 = vadd.f32 0.0, %v300
    %302 = vmatmul.bf16.gmra.mxu0 %v202
    %v303 = vpop.f32.mrf.mxu0
    %v304 = vadd.f32 0.0, %v303
    %v305 = vpop.f32.mrf.mxu0
    %v306 = vadd.f32 0.0, %v305
    %307 = vdwg.mxu0
    %v324 = vunpack.c.l.b16 %v115
    %v325 = vunpack.c.l.b16 %v116
    %v326 = vunpack.c.l.b16 %v117
    %v327 = vunpack.c.l.b16 %v118
    %v328 = vunpack.c.l.b16 %v119
    %v329 = vunpack.c.l.b16 %v120
    %v330 = vunpack.c.l.b16 %v121
    %v331 = vunpack.c.l.b16 %v122
    %v332 = vunpack.c.l.b16 %v123
    %v333 = vunpack.c.l.b16 %v124
    %v334 = vunpack.c.l.b16 %v125
    %v335 = vunpack.c.l.b16 %v126
    %v336 = vunpack.c.l.b16 %v127
    %v337 = vunpack.c.l.b16 %v128
    %v338 = vunpack.c.l.b16 %v129
    %v339 = vunpack.c.l.b16 %v130
    %v340 = vpack.c.b16 %v325, %v324
    %v341 = vpack.c.b16 %v327, %v326
    %v342 = vpack.c.b16 %v329, %v328
    %v343 = vpack.c.b16 %v331, %v330
    %v344 = vpack.c.b16 %v333, %v332
    %v345 = vpack.c.b16 %v335, %v334
    %v346 = vpack.c.b16 %v337, %v336
    %v347 = vpack.c.b16 %v339, %v338
    %v372 = vunpack.c.l.b16 %v147
    %v373 = vunpack.c.l.b16 %v148
    %v374 = vunpack.c.l.b16 %v149
    %v375 = vunpack.c.l.b16 %v150
    %v376 = vunpack.c.l.b16 %v151
    %v377 = vunpack.c.l.b16 %v152
    %v378 = vunpack.c.l.b16 %v153
    %v379 = vunpack.c.l.b16 %v154
    %v380 = vunpack.c.l.b16 %v155
    %v381 = vunpack.c.l.b16 %v156
    %v382 = vunpack.c.l.b16 %v157
    %v383 = vunpack.c.l.b16 %v158
    %v384 = vunpack.c.l.b16 %v159
    %v385 = vunpack.c.l.b16 %v160
    %v386 = vunpack.c.l.b16 %v161
    %v387 = vunpack.c.l.b16 %v162
    %v388 = vpack.c.b16 %v373, %v372
    %v389 = vpack.c.b16 %v375, %v374
    %v390 = vpack.c.b16 %v377, %v376
    %v391 = vpack.c.b16 %v379, %v378
    %v392 = vpack.c.b16 %v381, %v380
    %v393 = vpack.c.b16 %v383, %v382
    %v394 = vpack.c.b16 %v385, %v384
    %v395 = vpack.c.b16 %v387, %v386
    %404 = vmatpush.bf16.msra.mxu0 %v395
    %405 = vmatpush.bf16.msra.mxu0 %v394
    %406 = vmatpush.bf16.msra.mxu0 %v393
    %407 = vmatpush.bf16.msra.mxu0 %v392
    %408 = vmatpush.bf16.msra.mxu0 %v391
    %409 = vmatpush.bf16.msra.mxu0 %v390
    %410 = vmatpush.bf16.msra.mxu0 %v389
    %411 = vmatpush.bf16.msra.mxu0 %v388
    %412 = vmatmul.bf16.gmra.mxu0 %v340
    %v413 = vpop.f32.mrf.mxu0
    %v414 = vadd.f32 0.0, %v413
    %v415 = vpop.f32.mrf.mxu0
    %v416 = vadd.f32 0.0, %v415
    %417 = vmatmul.bf16.gmra.mxu0 %v341
    %v418 = vpop.f32.mrf.mxu0
    %v419 = vadd.f32 0.0, %v418
    %v420 = vpop.f32.mrf.mxu0
    %v421 = vadd.f32 0.0, %v420
    %422 = vmatmul.bf16.gmra.mxu0 %v342
    %v423 = vpop.f32.mrf.mxu0
    %v424 = vadd.f32 0.0, %v423
    %v425 = vpop.f32.mrf.mxu0
    %v426 = vadd.f32 0.0, %v425
    %427 = vmatmul.bf16.gmra.mxu0 %v343
    %v428 = vpop.f32.mrf.mxu0
    %v429 = vadd.f32 0.0, %v428
    %v430 = vpop.f32.mrf.mxu0
    %v431 = vadd.f32 0.0, %v430
    %432 = vmatmul.bf16.gmra.mxu0 %v344
    %v433 = vpop.f32.mrf.mxu0
    %v434 = vadd.f32 0.0, %v433
    %v435 = vpop.f32.mrf.mxu0
    %v436 = vadd.f32 0.0, %v435
    %437 = vmatmul.bf16.gmra.mxu0 %v345
    %v438 = vpop.f32.mrf.mxu0
    %v439 = vadd.f32 0.0, %v438
    %v440 = vpop.f32.mrf.mxu0
    %v441 = vadd.f32 0.0, %v440
    %442 = vmatmul.bf16.gmra.mxu0 %v346
    %v443 = vpop.f32.mrf.mxu0
    %v444 = vadd.f32 0.0, %v443
    %v445 = vpop.f32.mrf.mxu0
    %v446 = vadd.f32 0.0, %v445
    %447 = vmatmul.bf16.gmra.mxu0 %v347
    %v448 = vpop.f32.mrf.mxu0
    %v449 = vadd.f32 0.0, %v448
    %v450 = vpop.f32.mrf.mxu0
    %v451 = vadd.f32 0.0, %v450
    %452 = vdwg.mxu0
    %v453 = vpack.c.bf16 %v271, %v269
    %v454 = vpack.c.bf16 %v276, %v274
    %v455 = vpack.c.bf16 %v281, %v279
    %v456 = vpack.c.bf16 %v286, %v284
    %v457 = vpack.c.bf16 %v291, %v289
    %v458 = vpack.c.bf16 %v296, %v294
    %v459 = vpack.c.bf16 %v301, %v299
    %v460 = vpack.c.bf16 %v306, %v304
    %v461 = vpack.c.bf16 %v416, %v414
    %v462 = vpack.c.bf16 %v421, %v419
    %v463 = vpack.c.bf16 %v426, %v424
    %v464 = vpack.c.bf16 %v431, %v429
    %v465 = vpack.c.bf16 %v436, %v434
    %v466 = vpack.c.bf16 %v441, %v439
    %v467 = vpack.c.bf16 %v446, %v444
    %v468 = vpack.c.bf16 %v451, %v449
    %v469 = vld [vmem:[#allocation7] sm:$0xf]
    %v470 = vld [vmem:[#allocation7 + $0x4] sm:$0xf]
    %v471 = vld [vmem:[#allocation7 + $0x8] sm:$0xf]
    %v472 = vld [vmem:[#allocation7 + $0xc] sm:$0xf]
    %v473 = vld [vmem:[#allocation7 + $0x10] sm:$0xf]
    %v474 = vld [vmem:[#allocation7 + $0x14] sm:$0xf]
    %v475 = vld [vmem:[#allocation7 + $0x18] sm:$0xf]
    %v476 = vld [vmem:[#allocation7 + $0x1c] sm:$0xf]
    %v477 = vld [vmem:[#allocation7 + $0x20] sm:$0xf]
    %v478 = vld [vmem:[#allocation7 + $0x24] sm:$0xf]
    %v479 = vld [vmem:[#allocation7 + $0x28] sm:$0xf]
    %v480 = vld [vmem:[#allocation7 + $0x2c] sm:$0xf]
    %v481 = vld [vmem:[#allocation7 + $0x30] sm:$0xf]
    %v482 = vld [vmem:[#allocation7 + $0x34] sm:$0xf]
    %v483 = vld [vmem:[#allocation7 + $0x38] sm:$0xf]
    %v484 = vld [vmem:[#allocation7 + $0x3c] sm:$0xf]
    %v485 = vld [vmem:[%s3] sm:$0x1]
    %v487 = vperm.slane %v485, 0
    %v505 = vunpack.c.l.b16 %v469
    %v506 = vunpack.c.l.b16 %v470
    %v507 = vunpack.c.l.b16 %v471
    %v508 = vunpack.c.l.b16 %v472
    %v509 = vunpack.c.l.b16 %v473
    %v510 = vunpack.c.l.b16 %v474
    %v511 = vunpack.c.l.b16 %v475
    %v512 = vunpack.c.l.b16 %v476
    %v513 = vunpack.c.l.b16 %v477
    %v514 = vunpack.c.l.b16 %v478
    %v515 = vunpack.c.l.b16 %v479
    %v516 = vunpack.c.l.b16 %v480
    %v517 = vunpack.c.l.b16 %v481
    %v518 = vunpack.c.l.b16 %v482
    %v519 = vunpack.c.l.b16 %v483
    %v520 = vunpack.c.l.b16 %v484
    %v521 = vpack.c.b16 %v506, %v505
    %v522 = vpack.c.b16 %v508, %v507
    %v523 = vpack.c.b16 %v510, %v509
    %v524 = vpack.c.b16 %v512, %v511
    %v525 = vpack.c.b16 %v514, %v513
    %v526 = vpack.c.b16 %v516, %v515
    %v527 = vpack.c.b16 %v518, %v517
    %v528 = vpack.c.b16 %v520, %v519
    %537 = vmatpush.bf16.msra.mxu0 %v528
    %538 = vmatpush.bf16.msra.mxu0 %v527
    %539 = vmatpush.bf16.msra.mxu0 %v526
    %540 = vmatpush.bf16.msra.mxu0 %v525
    %541 = vmatpush.bf16.msra.mxu0 %v524
    %542 = vmatpush.bf16.msra.mxu0 %v523
    %543 = vmatpush.bf16.msra.mxu0 %v522
    %544 = vmatpush.bf16.msra.mxu0 %v521
    %545 = vmatmul.bf16.gmra.mxu0 %v453
    %v546 = vpop.f32.mrf.mxu0
    %v547 = vadd.f32 %v487, %v546
    %v548 = vpop.f32.mrf.mxu0
    %v549 = vadd.f32 %v487, %v548
    %550 = vmatmul.bf16.gmra.mxu0 %v454
    %v551 = vpop.f32.mrf.mxu0
    %v552 = vadd.f32 %v487, %v551
    %v553 = vpop.f32.mrf.mxu0
    %v554 = vadd.f32 %v487, %v553
    %555 = vmatmul.bf16.gmra.mxu0 %v455
    %v556 = vpop.f32.mrf.mxu0
    %v557 = vadd.f32 %v487, %v556
    %v558 = vpop.f32.mrf.mxu0
    %v559 = vadd.f32 %v487, %v558
    %560 = vmatmul.bf16.gmra.mxu0 %v456
    %v561 = vpop.f32.mrf.mxu0
    %v562 = vadd.f32 %v487, %v561
    %v563 = vpop.f32.mrf.mxu0
    %v564 = vadd.f32 %v487, %v563
    %565 = vmatmul.bf16.gmra.mxu0 %v457
    %v566 = vpop.f32.mrf.mxu0
    %v567 = vadd.f32 %v487, %v566
    %v568 = vpop.f32.mrf.mxu0
    %v569 = vadd.f32 %v487, %v568
    %570 = vmatmul.bf16.gmra.mxu0 %v458
    %v571 = vpop.f32.mrf.mxu0
    %v572 = vadd.f32 %v487, %v571
    %v573 = vpop.f32.mrf.mxu0
    %v574 = vadd.f32 %v487, %v573
    %575 = vmatmul.bf16.gmra.mxu0 %v459
    %v576 = vpop.f32.mrf.mxu0
    %v577 = vadd.f32 %v487, %v576
    %v578 = vpop.f32.mrf.mxu0
    %v579 = vadd.f32 %v487, %v578
    %580 = vmatmul.bf16.gmra.mxu0 %v460
    %v581 = vpop.f32.mrf.mxu0
    %v582 = vadd.f32 %v487, %v581
    %v583 = vpop.f32.mrf.mxu0
    %v584 = vadd.f32 %v487, %v583
    %585 = vmatmul.bf16.gmra.mxu0 %v461
    %v586 = vpop.f32.mrf.mxu0
    %v587 = vadd.f32 %v487, %v586
    %v588 = vpop.f32.mrf.mxu0
    %v589 = vadd.f32 %v487, %v588
    %590 = vmatmul.bf16.gmra.mxu0 %v462
    %v591 = vpop.f32.mrf.mxu0
    %v592 = vadd.f32 %v487, %v591
    %v593 = vpop.f32.mrf.mxu0
    %v594 = vadd.f32 %v487, %v593
    %595 = vmatmul.bf16.gmra.mxu0 %v463
    %v596 = vpop.f32.mrf.mxu0
    %v597 = vadd.f32 %v487, %v596
    %v598 = vpop.f32.mrf.mxu0
    %v599 = vadd.f32 %v487, %v598
    %600 = vmatmul.bf16.gmra.mxu0 %v464
    %v601 = vpop.f32.mrf.mxu0
    %v602 = vadd.f32 %v487, %v601
    %v603 = vpop.f32.mrf.mxu0
    %v604 = vadd.f32 %v487, %v603
    %605 = vmatmul.bf16.gmra.mxu0 %v465
    %v606 = vpop.f32.mrf.mxu0
    %v607 = vadd.f32 %v487, %v606
    %v608 = vpop.f32.mrf.mxu0
    %v609 = vadd.f32 %v487, %v608
    %610 = vmatmul.bf16.gmra.mxu0 %v466
    %v611 = vpop.f32.mrf.mxu0
    %v612 = vadd.f32 %v487, %v611
    %v613 = vpop.f32.mrf.mxu0
    %v614 = vadd.f32 %v487, %v613
    %615 = vmatmul.bf16.gmra.mxu0 %v467
    %v616 = vpop.f32.mrf.mxu0
    %v617 = vadd.f32 %v487, %v616
    %v618 = vpop.f32.mrf.mxu0
    %v619 = vadd.f32 %v487, %v618
    %620 = vmatmul.bf16.gmra.mxu0 %v468
    %v621 = vpop.f32.mrf.mxu0
    %v622 = vadd.f32 %v487, %v621
    %v623 = vpop.f32.mrf.mxu0
    %v624 = vadd.f32 %v487, %v623
    %625 = vdwg.mxu0
    %v626 = vmax.f32 %v547, 0.0
    %v627 = vmax.f32 %v549, 0.0
    %v628 = vmax.f32 %v552, 0.0
    %v629 = vmax.f32 %v554, 0.0
    %v630 = vmax.f32 %v557, 0.0
    %v631 = vmax.f32 %v559, 0.0
    %v632 = vmax.f32 %v562, 0.0
    %v633 = vmax.f32 %v564, 0.0
    %v634 = vmax.f32 %v567, 0.0
    %v635 = vmax.f32 %v569, 0.0
    %v636 = vmax.f32 %v572, 0.0
    %v637 = vmax.f32 %v574, 0.0
    %v638 = vmax.f32 %v577, 0.0
    %v639 = vmax.f32 %v579, 0.0
    %v640 = vmax.f32 %v582, 0.0
    %v641 = vmax.f32 %v584, 0.0
    %v642 = vmax.f32 %v587, 0.0
    %v643 = vmax.f32 %v589, 0.0
    %v644 = vmax.f32 %v592, 0.0
    %v645 = vmax.f32 %v594, 0.0
    %v646 = vmax.f32 %v597, 0.0
    %v647 = vmax.f32 %v599, 0.0
    %v648 = vmax.f32 %v602, 0.0
    %v649 = vmax.f32 %v604, 0.0
    %v650 = vmax.f32 %v607, 0.0
    %v651 = vmax.f32 %v609, 0.0
    %v652 = vmax.f32 %v612, 0.0
    %v653 = vmax.f32 %v614, 0.0
    %v654 = vmax.f32 %v617, 0.0
    %v655 = vmax.f32 %v619, 0.0
    %v656 = vmax.f32 %v622, 0.0
    %v657 = vmax.f32 %v624, 0.0
    %658 = vadd.xlane.f32.xlu0 %v626
    %v659 = vpop.xlane.xlu0 %658
    %660 = vadd.xlane.f32.xlu0 %v627
    %v661 = vpop.xlane.xlu0 %660
    %662 = vadd.xlane.f32.xlu0 %v628
    %v663 = vpop.xlane.xlu0 %662
    %664 = vadd.xlane.f32.xlu0 %v629
    %v665 = vpop.xlane.xlu0 %664
    %666 = vadd.xlane.f32.xlu0 %v630
    %v667 = vpop.xlane.xlu0 %666
    %668 = vadd.xlane.f32.xlu0 %v631
    %v669 = vpop.xlane.xlu0 %668
    %670 = vadd.xlane.f32.xlu0 %v632
    %v671 = vpop.xlane.xlu0 %670
    %672 = vadd.xlane.f32.xlu0 %v633
    %v673 = vpop.xlane.xlu0 %672
    %674 = vadd.xlane.f32.xlu0 %v634
    %v675 = vpop.xlane.xlu0 %674
    %676 = vadd.xlane.f32.xlu0 %v635
    %v677 = vpop.xlane.xlu0 %676
    %678 = vadd.xlane.f32.xlu0 %v636
    %v679 = vpop.xlane.xlu0 %678
    %680 = vadd.xlane.f32.xlu0 %v637
    %v681 = vpop.xlane.xlu0 %680
    %682 = vadd.xlane.f32.xlu0 %v638
    %v683 = vpop.xlane.xlu0 %682
    %684 = vadd.xlane.f32.xlu0 %v639
    %v685 = vpop.xlane.xlu0 %684
    %686 = vadd.xlane.f32.xlu0 %v640
    %v687 = vpop.xlane.xlu0 %686
    %688 = vadd.xlane.f32.xlu0 %v641
    %v689 = vpop.xlane.xlu0 %688
    %690 = vadd.xlane.f32.xlu0 %v642
    %v691 = vpop.xlane.xlu0 %690
    %692 = vadd.xlane.f32.xlu0 %v643
    %v693 = vpop.xlane.xlu0 %692
    %694 = vadd.xlane.f32.xlu0 %v644
    %v695 = vpop.xlane.xlu0 %694
    %696 = vadd.xlane.f32.xlu0 %v645
    %v697 = vpop.xlane.xlu0 %696
    %698 = vadd.xlane.f32.xlu0 %v646
    %v699 = vpop.xlane.xlu0 %698
    %700 = vadd.xlane.f32.xlu0 %v647
    %v701 = vpop.xlane.xlu0 %700
    %702 = vadd.xlane.f32.xlu0 %v648
    %v703 = vpop.xlane.xlu0 %702
    %704 = vadd.xlane.f32.xlu0 %v649
    %v705 = vpop.xlane.xlu0 %704
    %706 = vadd.xlane.f32.xlu0 %v650
    %v707 = vpop.xlane.xlu0 %706
    %708 = vadd.xlane.f32.xlu0 %v651
    %v709 = vpop.xlane.xlu0 %708
    %710 = vadd.xlane.f32.xlu0 %v652
    %v711 = vpop.xlane.xlu0 %710
    %712 = vadd.xlane.f32.xlu0 %v653
    %v713 = vpop.xlane.xlu0 %712
    %714 = vadd.xlane.f32.xlu0 %v654
    %v715 = vpop.xlane.xlu0 %714
    %716 = vadd.xlane.f32.xlu0 %v655
    %v717 = vpop.xlane.xlu0 %716
    %718 = vadd.xlane.f32.xlu0 %v656
    %v719 = vpop.xlane.xlu0 %718
    %720 = vadd.xlane.f32.xlu0 %v657
    %v721 = vpop.xlane.xlu0 %720
    %v722 = vmul.f32 %v659, 0.03125
    %v723 = vmul.f32 %v661, 0.03125
    %v724 = vmul.f32 %v663, 0.03125
    %v725 = vmul.f32 %v665, 0.03125
    %v726 = vmul.f32 %v667, 0.03125
    %v727 = vmul.f32 %v669, 0.03125
    %v728 = vmul.f32 %v671, 0.03125
    %v729 = vmul.f32 %v673, 0.03125
    %v730 = vmul.f32 %v675, 0.03125
    %v731 = vmul.f32 %v677, 0.03125
    %v732 = vmul.f32 %v679, 0.03125
    %v733 = vmul.f32 %v681, 0.03125
    %v734 = vmul.f32 %v683, 0.03125
    %v735 = vmul.f32 %v685, 0.03125
    %v736 = vmul.f32 %v687, 0.03125
    %v737 = vmul.f32 %v689, 0.03125
    %v738 = vmul.f32 %v691, 0.03125
    %v739 = vmul.f32 %v693, 0.03125
    %v740 = vmul.f32 %v695, 0.03125
    %v741 = vmul.f32 %v697, 0.03125
    %v742 = vmul.f32 %v699, 0.03125
    %v743 = vmul.f32 %v701, 0.03125
    %v744 = vmul.f32 %v703, 0.03125
    %v745 = vmul.f32 %v705, 0.03125
    %v746 = vmul.f32 %v707, 0.03125
    %v747 = vmul.f32 %v709, 0.03125
    %v748 = vmul.f32 %v711, 0.03125
    %v749 = vmul.f32 %v713, 0.03125
    %v750 = vmul.f32 %v715, 0.03125
    %v751 = vmul.f32 %v717, 0.03125
    %v752 = vmul.f32 %v719, 0.03125
    %v753 = vmul.f32 %v721, 0.03125
    %v754 = vmul.f32 %v626, %v626
    %v755 = vmul.f32 %v627, %v627
    %v756 = vmul.f32 %v628, %v628
    %v757 = vmul.f32 %v629, %v629
    %v758 = vmul.f32 %v630, %v630
    %v759 = vmul.f32 %v631, %v631
    %v760 = vmul.f32 %v632, %v632
    %v761 = vmul.f32 %v633, %v633
    %v762 = vmul.f32 %v634, %v634
    %v763 = vmul.f32 %v635, %v635
    %v764 = vmul.f32 %v636, %v636
    %v765 = vmul.f32 %v637, %v637
    %v766 = vmul.f32 %v638, %v638
    %v767 = vmul.f32 %v639, %v639
    %v768 = vmul.f32 %v640, %v640
    %v769 = vmul.f32 %v641, %v641
    %v770 = vmul.f32 %v642, %v642
    %v771 = vmul.f32 %v643, %v643
    %v772 = vmul.f32 %v644, %v644
    %v773 = vmul.f32 %v645, %v645
    %v774 = vmul.f32 %v646, %v646
    %v775 = vmul.f32 %v647, %v647
    %v776 = vmul.f32 %v648, %v648
    %v777 = vmul.f32 %v649, %v649
    %v778 = vmul.f32 %v650, %v650
    %v779 = vmul.f32 %v651, %v651
    %v780 = vmul.f32 %v652, %v652
    %v781 = vmul.f32 %v653, %v653
    %v782 = vmul.f32 %v654, %v654
    %v783 = vmul.f32 %v655, %v655
    %v784 = vmul.f32 %v656, %v656
    %v785 = vmul.f32 %v657, %v657
    %786 = vadd.xlane.f32.xlu0 %v754
    %v787 = vpop.xlane.xlu0 %786
    %788 = vadd.xlane.f32.xlu0 %v755
    %v789 = vpop.xlane.xlu0 %788
    %790 = vadd.xlane.f32.xlu0 %v756
    %v791 = vpop.xlane.xlu0 %790
    %792 = vadd.xlane.f32.xlu0 %v757
    %v793 = vpop.xlane.xlu0 %792
    %794 = vadd.xlane.f32.xlu0 %v758
    %v795 = vpop.xlane.xlu0 %794
    %796 = vadd.xlane.f32.xlu0 %v759
    %v797 = vpop.xlane.xlu0 %796
    %798 = vadd.xlane.f32.xlu0 %v760
    %v799 = vpop.xlane.xlu0 %798
    %800 = vadd.xlane.f32.xlu0 %v761
    %v801 = vpop.xlane.xlu0 %800
    %802 = vadd.xlane.f32.xlu0 %v762
    %v803 = vpop.xlane.xlu0 %802
    %804 = vadd.xlane.f32.xlu0 %v763
    %v805 = vpop.xlane.xlu0 %804
    %806 = vadd.xlane.f32.xlu0 %v764
    %v807 = vpop.xlane.xlu0 %806
    %808 = vadd.xlane.f32.xlu0 %v765
    %v809 = vpop.xlane.xlu0 %808
    %810 = vadd.xlane.f32.xlu0 %v766
    %v811 = vpop.xlane.xlu0 %810
    %812 = vadd.xlane.f32.xlu0 %v767
    %v813 = vpop.xlane.xlu0 %812
    %814 = vadd.xlane.f32.xlu0 %v768
    %v815 = vpop.xlane.xlu0 %814
    %816 = vadd.xlane.f32.xlu0 %v769
    %v817 = vpop.xlane.xlu0 %816
    %818 = vadd.xlane.f32.xlu0 %v770
    %v819 = vpop.xlane.xlu0 %818
    %820 = vadd.xlane.f32.xlu0 %v771
    %v821 = vpop.xlane.xlu0 %820
    %822 = vadd.xlane.f32.xlu0 %v772
    %v823 = vpop.xlane.xlu0 %822
    %824 = vadd.xlane.f32.xlu0 %v773
    %v825 = vpop.xlane.xlu0 %824
    %826 = vadd.xlane.f32.xlu0 %v774
    %v827 = vpop.xlane.xlu0 %826
    %828 = vadd.xlane.f32.xlu0 %v775
    %v829 = vpop.xlane.xlu0 %828
    %830 = vadd.xlane.f32.xlu0 %v776
    %v831 = vpop.xlane.xlu0 %830
    %832 = vadd.xlane.f32.xlu0 %v777
    %v833 = vpop.xlane.xlu0 %832
    %834 = vadd.xlane.f32.xlu0 %v778
    %v835 = vpop.xlane.xlu0 %834
    %836 = vadd.xlane.f32.xlu0 %v779
    %v837 = vpop.xlane.xlu0 %836
    %838 = vadd.xlane.f32.xlu0 %v780
    %v839 = vpop.xlane.xlu0 %838
    %840 = vadd.xlane.f32.xlu0 %v781
    %v841 = vpop.xlane.xlu0 %840
    %842 = vadd.xlane.f32.xlu0 %v782
    %v843 = vpop.xlane.xlu0 %842
    %844 = vadd.xlane.f32.xlu0 %v783
    %v845 = vpop.xlane.xlu0 %844
    %846 = vadd.xlane.f32.xlu0 %v784
    %v847 = vpop.xlane.xlu0 %846
    %848 = vadd.xlane.f32.xlu0 %v785
    %v849 = vpop.xlane.xlu0 %848
    %v850 = vmul.f32 %v787, 0.03125
    %v851 = vmul.f32 %v789, 0.03125
    %v852 = vmul.f32 %v791, 0.03125
    %v853 = vmul.f32 %v793, 0.03125
    %v854 = vmul.f32 %v795, 0.03125
    %v855 = vmul.f32 %v797, 0.03125
    %v856 = vmul.f32 %v799, 0.03125
    %v857 = vmul.f32 %v801, 0.03125
    %v858 = vmul.f32 %v803, 0.03125
    %v859 = vmul.f32 %v805, 0.03125
    %v860 = vmul.f32 %v807, 0.03125
    %v861 = vmul.f32 %v809, 0.03125
    %v862 = vmul.f32 %v811, 0.03125
    %v863 = vmul.f32 %v813, 0.03125
    %v864 = vmul.f32 %v815, 0.03125
    %v865 = vmul.f32 %v817, 0.03125
    %v866 = vmul.f32 %v819, 0.03125
    %v867 = vmul.f32 %v821, 0.03125
    %v868 = vmul.f32 %v823, 0.03125
    %v869 = vmul.f32 %v825, 0.03125
    %v870 = vmul.f32 %v827, 0.03125
    %v871 = vmul.f32 %v829, 0.03125
    %v872 = vmul.f32 %v831, 0.03125
    %v873 = vmul.f32 %v833, 0.03125
    %v874 = vmul.f32 %v835, 0.03125
    %v875 = vmul.f32 %v837, 0.03125
    %v876 = vmul.f32 %v839, 0.03125
    %v877 = vmul.f32 %v841, 0.03125
    %v878 = vmul.f32 %v843, 0.03125
    %v879 = vmul.f32 %v845, 0.03125
    %v880 = vmul.f32 %v847, 0.03125
    %v881 = vmul.f32 %v849, 0.03125
    %v882 = vmul.f32 %v722, %v722
    %v883 = vmul.f32 %v723, %v723
    %v884 = vmul.f32 %v724, %v724
    %v885 = vmul.f32 %v725, %v725
    %v886 = vmul.f32 %v726, %v726
    %v887 = vmul.f32 %v727, %v727
    %v888 = vmul.f32 %v728, %v728
    %v889 = vmul.f32 %v729, %v729
    %v890 = vmul.f32 %v730, %v730
    %v891 = vmul.f32 %v731, %v731
    %v892 = vmul.f32 %v732, %v732
    %v893 = vmul.f32 %v733, %v733
    %v894 = vmul.f32 %v734, %v734
    %v895 = vmul.f32 %v735, %v735
    %v896 = vmul.f32 %v736, %v736
    %v897 = vmul.f32 %v737, %v737
    %v898 = vmul.f32 %v738, %v738
    %v899 = vmul.f32 %v739, %v739
    %v900 = vmul.f32 %v740, %v740
    %v901 = vmul.f32 %v741, %v741
    %v902 = vmul.f32 %v742, %v742
    %v903 = vmul.f32 %v743, %v743
    %v904 = vmul.f32 %v744, %v744
    %v905 = vmul.f32 %v745, %v745
    %v906 = vmul.f32 %v746, %v746
    %v907 = vmul.f32 %v747, %v747
    %v908 = vmul.f32 %v748, %v748
    %v909 = vmul.f32 %v749, %v749
    %v910 = vmul.f32 %v750, %v750
    %v911 = vmul.f32 %v751, %v751
    %v912 = vmul.f32 %v752, %v752
    %v913 = vmul.f32 %v753, %v753
    %v914 = vsub.f32 %v850, %v882
    %v915 = vsub.f32 %v851, %v883
    %v916 = vsub.f32 %v852, %v884
    %v917 = vsub.f32 %v853, %v885
    %v918 = vsub.f32 %v854, %v886
    %v919 = vsub.f32 %v855, %v887
    %v920 = vsub.f32 %v856, %v888
    %v921 = vsub.f32 %v857, %v889
    %v922 = vsub.f32 %v858, %v890
    %v923 = vsub.f32 %v859, %v891
    %v924 = vsub.f32 %v860, %v892
    %v925 = vsub.f32 %v861, %v893
    %v926 = vsub.f32 %v862, %v894
    %v927 = vsub.f32 %v863, %v895
    %v928 = vsub.f32 %v864, %v896
    %v929 = vsub.f32 %v865, %v897
    %v930 = vsub.f32 %v866, %v898
    %v931 = vsub.f32 %v867, %v899
    %v932 = vsub.f32 %v868, %v900
    %v933 = vsub.f32 %v869, %v901
    %v934 = vsub.f32 %v870, %v902
    %v935 = vsub.f32 %v871, %v903
    %v936 = vsub.f32 %v872, %v904
    %v937 = vsub.f32 %v873, %v905
    %v938 = vsub.f32 %v874, %v906
    %v939 = vsub.f32 %v875, %v907
    %v940 = vsub.f32 %v876, %v908
    %v941 = vsub.f32 %v877, %v909
    %v942 = vsub.f32 %v878, %v910
    %v943 = vsub.f32 %v879, %v911
    %v944 = vsub.f32 %v880, %v912
    %v945 = vsub.f32 %v881, %v913
    %v946 = vmax.f32 %v914, 0.0
    %v947 = vmax.f32 %v915, 0.0
    %v948 = vmax.f32 %v916, 0.0
    %v949 = vmax.f32 %v917, 0.0
    %v950 = vmax.f32 %v918, 0.0
    %v951 = vmax.f32 %v919, 0.0
    %v952 = vmax.f32 %v920, 0.0
    %v953 = vmax.f32 %v921, 0.0
    %v954 = vmax.f32 %v922, 0.0
    %v955 = vmax.f32 %v923, 0.0
    %v956 = vmax.f32 %v924, 0.0
    %v957 = vmax.f32 %v925, 0.0
    %v958 = vmax.f32 %v926, 0.0
    %v959 = vmax.f32 %v927, 0.0
    %v960 = vmax.f32 %v928, 0.0
    %v961 = vmax.f32 %v929, 0.0
    %v962 = vmax.f32 %v930, 0.0
    %v963 = vmax.f32 %v931, 0.0
    %v964 = vmax.f32 %v932, 0.0
    %v965 = vmax.f32 %v933, 0.0
    %v966 = vmax.f32 %v934, 0.0
    %v967 = vmax.f32 %v935, 0.0
    %v968 = vmax.f32 %v936, 0.0
    %v969 = vmax.f32 %v937, 0.0
    %v970 = vmax.f32 %v938, 0.0
    %v971 = vmax.f32 %v939, 0.0
    %v972 = vmax.f32 %v940, 0.0
    %v973 = vmax.f32 %v941, 0.0
    %v974 = vmax.f32 %v942, 0.0
    %v975 = vmax.f32 %v943, 0.0
    %v976 = vmax.f32 %v944, 0.0
    %v977 = vmax.f32 %v945, 0.0
    %v978 = vsub.f32 %v626, %v722
    %v979 = vsub.f32 %v627, %v723
    %v980 = vsub.f32 %v628, %v724
    %v981 = vsub.f32 %v629, %v725
    %v982 = vsub.f32 %v630, %v726
    %v983 = vsub.f32 %v631, %v727
    %v984 = vsub.f32 %v632, %v728
    %v985 = vsub.f32 %v633, %v729
    %v986 = vsub.f32 %v634, %v730
    %v987 = vsub.f32 %v635, %v731
    %v988 = vsub.f32 %v636, %v732
    %v989 = vsub.f32 %v637, %v733
    %v990 = vsub.f32 %v638, %v734
    %v991 = vsub.f32 %v639, %v735
    %v992 = vsub.f32 %v640, %v736
    %v993 = vsub.f32 %v641, %v737
    %v994 = vsub.f32 %v642, %v738
    %v995 = vsub.f32 %v643, %v739
    %v996 = vsub.f32 %v644, %v740
    %v997 = vsub.f32 %v645, %v741
    %v998 = vsub.f32 %v646, %v742
    %v999 = vsub.f32 %v647, %v743
    %v1000 = vsub.f32 %v648, %v744
    %v1001 = vsub.f32 %v649, %v745
    %v1002 = vsub.f32 %v650, %v746
    %v1003 = vsub.f32 %v651, %v747
    %v1004 = vsub.f32 %v652, %v748
    %v1005 = vsub.f32 %v653, %v749
    %v1006 = vsub.f32 %v654, %v750
    %v1007 = vsub.f32 %v655, %v751
    %v1008 = vsub.f32 %v656, %v752
    %v1009 = vsub.f32 %v657, %v753
    %v1010 = vadd.f32 %v946, 1e-05
    %v1011 = vadd.f32 %v947, 1e-05
    %v1012 = vadd.f32 %v948, 1e-05
    %v1013 = vadd.f32 %v949, 1e-05
    %v1014 = vadd.f32 %v950, 1e-05
    %v1015 = vadd.f32 %v951, 1e-05
    %v1016 = vadd.f32 %v952, 1e-05
    %v1017 = vadd.f32 %v953, 1e-05
    %v1018 = vadd.f32 %v954, 1e-05
    %v1019 = vadd.f32 %v955, 1e-05
    %v1020 = vadd.f32 %v956, 1e-05
    %v1021 = vadd.f32 %v957, 1e-05
    %v1022 = vadd.f32 %v958, 1e-05
    %v1023 = vadd.f32 %v959, 1e-05
    %v1024 = vadd.f32 %v960, 1e-05
    %v1025 = vadd.f32 %v961, 1e-05
    %v1026 = vadd.f32 %v962, 1e-05
    %v1027 = vadd.f32 %v963, 1e-05
    %v1028 = vadd.f32 %v964, 1e-05
    %v1029 = vadd.f32 %v965, 1e-05
    %v1030 = vadd.f32 %v966, 1e-05
    %v1031 = vadd.f32 %v967, 1e-05
    %v1032 = vadd.f32 %v968, 1e-05
    %v1033 = vadd.f32 %v969, 1e-05
    %v1034 = vadd.f32 %v970, 1e-05
    %v1035 = vadd.f32 %v971, 1e-05
    %v1036 = vadd.f32 %v972, 1e-05
    %v1037 = vadd.f32 %v973, 1e-05
    %v1038 = vadd.f32 %v974, 1e-05
    %v1039 = vadd.f32 %v975, 1e-05
    %v1040 = vadd.f32 %v976, 1e-05
    %v1041 = vadd.f32 %v977, 1e-05
    %v1042 = vrsqrt.pop %v1010
    %v1043 = vmul.f32 %v1042, %v1010
    %v1044 = vmul.f32 %v1043, %v1042
    %v1045 = vmul.f32 0.5, %v1044
    %v1046 = vsub.f32 1.5, %v1045
    %v1047 = vmul.f32 %v1042, %v1046
    %vm1048 = vweird.f32 %v1010
    %vm1049 = vweird.f32 %v1042
    %vm1050 = vmor %vm1048, %vm1049
    %v1051 = vsel %vm1050, %v1042, %v1047
    %v1052 = vrsqrt.pop %v1011
    %v1053 = vmul.f32 %v1052, %v1011
    %v1054 = vmul.f32 %v1053, %v1052
    %v1055 = vmul.f32 0.5, %v1054
    %v1056 = vsub.f32 1.5, %v1055
    %v1057 = vmul.f32 %v1052, %v1056
    %vm1058 = vweird.f32 %v1011
    %vm1059 = vweird.f32 %v1052
    %vm1060 = vmor %vm1058, %vm1059
    %v1061 = vsel %vm1060, %v1052, %v1057
    %v1062 = vrsqrt.pop %v1012
    %v1063 = vmul.f32 %v1062, %v1012
    %v1064 = vmul.f32 %v1063, %v1062
    %v1065 = vmul.f32 0.5, %v1064
    %v1066 = vsub.f32 1.5, %v1065
    %v1067 = vmul.f32 %v1062, %v1066
    %vm1068 = vweird.f32 %v1012
    %vm1069 = vweird.f32 %v1062
    %vm1070 = vmor %vm1068, %vm1069
    %v1071 = vsel %vm1070, %v1062, %v1067
    %v1072 = vrsqrt.pop %v1013
    %v1073 = vmul.f32 %v1072, %v1013
    %v1074 = vmul.f32 %v1073, %v1072
    %v1075 = vmul.f32 0.5, %v1074
    %v1076 = vsub.f32 1.5, %v1075
    %v1077 = vmul.f32 %v1072, %v1076
    %vm1078 = vweird.f32 %v1013
    %vm1079 = vweird.f32 %v1072
    %vm1080 = vmor %vm1078, %vm1079
    %v1081 = vsel %vm1080, %v1072, %v1077
    %v1082 = vrsqrt.pop %v1014
    %v1083 = vmul.f32 %v1082, %v1014
    %v1084 = vmul.f32 %v1083, %v1082
    %v1085 = vmul.f32 0.5, %v1084
    %v1086 = vsub.f32 1.5, %v1085
    %v1087 = vmul.f32 %v1082, %v1086
    %vm1088 = vweird.f32 %v1014
    %vm1089 = vweird.f32 %v1082
    %vm1090 = vmor %vm1088, %vm1089
    %v1091 = vsel %vm1090, %v1082, %v1087
    %v1092 = vrsqrt.pop %v1015
    %v1093 = vmul.f32 %v1092, %v1015
    %v1094 = vmul.f32 %v1093, %v1092
    %v1095 = vmul.f32 0.5, %v1094
    %v1096 = vsub.f32 1.5, %v1095
    %v1097 = vmul.f32 %v1092, %v1096
    %vm1098 = vweird.f32 %v1015
    %vm1099 = vweird.f32 %v1092
    %vm1100 = vmor %vm1098, %vm1099
    %v1101 = vsel %vm1100, %v1092, %v1097
    %v1102 = vrsqrt.pop %v1016
    %v1103 = vmul.f32 %v1102, %v1016
    %v1104 = vmul.f32 %v1103, %v1102
    %v1105 = vmul.f32 0.5, %v1104
    %v1106 = vsub.f32 1.5, %v1105
    %v1107 = vmul.f32 %v1102, %v1106
    %vm1108 = vweird.f32 %v1016
    %vm1109 = vweird.f32 %v1102
    %vm1110 = vmor %vm1108, %vm1109
    %v1111 = vsel %vm1110, %v1102, %v1107
    %v1112 = vrsqrt.pop %v1017
    %v1113 = vmul.f32 %v1112, %v1017
    %v1114 = vmul.f32 %v1113, %v1112
    %v1115 = vmul.f32 0.5, %v1114
    %v1116 = vsub.f32 1.5, %v1115
    %v1117 = vmul.f32 %v1112, %v1116
    %vm1118 = vweird.f32 %v1017
    %vm1119 = vweird.f32 %v1112
    %vm1120 = vmor %vm1118, %vm1119
    %v1121 = vsel %vm1120, %v1112, %v1117
    %v1122 = vrsqrt.pop %v1018
    %v1123 = vmul.f32 %v1122, %v1018
    %v1124 = vmul.f32 %v1123, %v1122
    %v1125 = vmul.f32 0.5, %v1124
    %v1126 = vsub.f32 1.5, %v1125
    %v1127 = vmul.f32 %v1122, %v1126
    %vm1128 = vweird.f32 %v1018
    %vm1129 = vweird.f32 %v1122
    %vm1130 = vmor %vm1128, %vm1129
    %v1131 = vsel %vm1130, %v1122, %v1127
    %v1132 = vrsqrt.pop %v1019
    %v1133 = vmul.f32 %v1132, %v1019
    %v1134 = vmul.f32 %v1133, %v1132
    %v1135 = vmul.f32 0.5, %v1134
    %v1136 = vsub.f32 1.5, %v1135
    %v1137 = vmul.f32 %v1132, %v1136
    %vm1138 = vweird.f32 %v1019
    %vm1139 = vweird.f32 %v1132
    %vm1140 = vmor %vm1138, %vm1139
    %v1141 = vsel %vm1140, %v1132, %v1137
    %v1142 = vrsqrt.pop %v1020
    %v1143 = vmul.f32 %v1142, %v1020
    %v1144 = vmul.f32 %v1143, %v1142
    %v1145 = vmul.f32 0.5, %v1144
    %v1146 = vsub.f32 1.5, %v1145
    %v1147 = vmul.f32 %v1142, %v1146
    %vm1148 = vweird.f32 %v1020
    %vm1149 = vweird.f32 %v1142
    %vm1150 = vmor %vm1148, %vm1149
    %v1151 = vsel %vm1150, %v1142, %v1147
    %v1152 = vrsqrt.pop %v1021
    %v1153 = vmul.f32 %v1152, %v1021
    %v1154 = vmul.f32 %v1153, %v1152
    %v1155 = vmul.f32 0.5, %v1154
    %v1156 = vsub.f32 1.5, %v1155
    %v1157 = vmul.f32 %v1152, %v1156
    %vm1158 = vweird.f32 %v1021
    %vm1159 = vweird.f32 %v1152
    %vm1160 = vmor %vm1158, %vm1159
    %v1161 = vsel %vm1160, %v1152, %v1157
    %v1162 = vrsqrt.pop %v1022
    %v1163 = vmul.f32 %v1162, %v1022
    %v1164 = vmul.f32 %v1163, %v1162
    %v1165 = vmul.f32 0.5, %v1164
    %v1166 = vsub.f32 1.5, %v1165
    %v1167 = vmul.f32 %v1162, %v1166
    %vm1168 = vweird.f32 %v1022
    %vm1169 = vweird.f32 %v1162
    %vm1170 = vmor %vm1168, %vm1169
    %v1171 = vsel %vm1170, %v1162, %v1167
    %v1172 = vrsqrt.pop %v1023
    %v1173 = vmul.f32 %v1172, %v1023
    %v1174 = vmul.f32 %v1173, %v1172
    %v1175 = vmul.f32 0.5, %v1174
    %v1176 = vsub.f32 1.5, %v1175
    %v1177 = vmul.f32 %v1172, %v1176
    %vm1178 = vweird.f32 %v1023
    %vm1179 = vweird.f32 %v1172
    %vm1180 = vmor %vm1178, %vm1179
    %v1181 = vsel %vm1180, %v1172, %v1177
    %v1182 = vrsqrt.pop %v1024
    %v1183 = vmul.f32 %v1182, %v1024
    %v1184 = vmul.f32 %v1183, %v1182
    %v1185 = vmul.f32 0.5, %v1184
    %v1186 = vsub.f32 1.5, %v1185
    %v1187 = vmul.f32 %v1182, %v1186
    %vm1188 = vweird.f32 %v1024
    %vm1189 = vweird.f32 %v1182
    %vm1190 = vmor %vm1188, %vm1189
    %v1191 = vsel %vm1190, %v1182, %v1187
    %v1192 = vrsqrt.pop %v1025
    %v1193 = vmul.f32 %v1192, %v1025
    %v1194 = vmul.f32 %v1193, %v1192
    %v1195 = vmul.f32 0.5, %v1194
    %v1196 = vsub.f32 1.5, %v1195
    %v1197 = vmul.f32 %v1192, %v1196
    %vm1198 = vweird.f32 %v1025
    %vm1199 = vweird.f32 %v1192
    %vm1200 = vmor %vm1198, %vm1199
    %v1201 = vsel %vm1200, %v1192, %v1197
    %v1202 = vrsqrt.pop %v1026
    %v1203 = vmul.f32 %v1202, %v1026
    %v1204 = vmul.f32 %v1203, %v1202
    %v1205 = vmul.f32 0.5, %v1204
    %v1206 = vsub.f32 1.5, %v1205
    %v1207 = vmul.f32 %v1202, %v1206
    %vm1208 = vweird.f32 %v1026
    %vm1209 = vweird.f32 %v1202
    %vm1210 = vmor %vm1208, %vm1209
    %v1211 = vsel %vm1210, %v1202, %v1207
    %v1212 = vrsqrt.pop %v1027
    %v1213 = vmul.f32 %v1212, %v1027
    %v1214 = vmul.f32 %v1213, %v1212
    %v1215 = vmul.f32 0.5, %v1214
    %v1216 = vsub.f32 1.5, %v1215
    %v1217 = vmul.f32 %v1212, %v1216
    %vm1218 = vweird.f32 %v1027
    %vm1219 = vweird.f32 %v1212
    %vm1220 = vmor %vm1218, %vm1219
    %v1221 = vsel %vm1220, %v1212, %v1217
    %v1222 = vrsqrt.pop %v1028
    %v1223 = vmul.f32 %v1222, %v1028
    %v1224 = vmul.f32 %v1223, %v1222
    %v1225 = vmul.f32 0.5, %v1224
    %v1226 = vsub.f32 1.5, %v1225
    %v1227 = vmul.f32 %v1222, %v1226
    %vm1228 = vweird.f32 %v1028
    %vm1229 = vweird.f32 %v1222
    %vm1230 = vmor %vm1228, %vm1229
    %v1231 = vsel %vm1230, %v1222, %v1227
    %v1232 = vrsqrt.pop %v1029
    %v1233 = vmul.f32 %v1232, %v1029
    %v1234 = vmul.f32 %v1233, %v1232
    %v1235 = vmul.f32 0.5, %v1234
    %v1236 = vsub.f32 1.5, %v1235
    %v1237 = vmul.f32 %v1232, %v1236
    %vm1238 = vweird.f32 %v1029
    %vm1239 = vweird.f32 %v1232
    %vm1240 = vmor %vm1238, %vm1239
    %v1241 = vsel %vm1240, %v1232, %v1237
    %v1242 = vrsqrt.pop %v1030
    %v1243 = vmul.f32 %v1242, %v1030
    %v1244 = vmul.f32 %v1243, %v1242
    %v1245 = vmul.f32 0.5, %v1244
    %v1246 = vsub.f32 1.5, %v1245
    %v1247 = vmul.f32 %v1242, %v1246
    %vm1248 = vweird.f32 %v1030
    %vm1249 = vweird.f32 %v1242
    %vm1250 = vmor %vm1248, %vm1249
    %v1251 = vsel %vm1250, %v1242, %v1247
    %v1252 = vrsqrt.pop %v1031
    %v1253 = vmul.f32 %v1252, %v1031
    %v1254 = vmul.f32 %v1253, %v1252
    %v1255 = vmul.f32 0.5, %v1254
    %v1256 = vsub.f32 1.5, %v1255
    %v1257 = vmul.f32 %v1252, %v1256
    %vm1258 = vweird.f32 %v1031
    %vm1259 = vweird.f32 %v1252
    %vm1260 = vmor %vm1258, %vm1259
    %v1261 = vsel %vm1260, %v1252, %v1257
    %v1262 = vrsqrt.pop %v1032
    %v1263 = vmul.f32 %v1262, %v1032
    %v1264 = vmul.f32 %v1263, %v1262
    %v1265 = vmul.f32 0.5, %v1264
    %v1266 = vsub.f32 1.5, %v1265
    %v1267 = vmul.f32 %v1262, %v1266
    %vm1268 = vweird.f32 %v1032
    %vm1269 = vweird.f32 %v1262
    %vm1270 = vmor %vm1268, %vm1269
    %v1271 = vsel %vm1270, %v1262, %v1267
    %v1272 = vrsqrt.pop %v1033
    %v1273 = vmul.f32 %v1272, %v1033
    %v1274 = vmul.f32 %v1273, %v1272
    %v1275 = vmul.f32 0.5, %v1274
    %v1276 = vsub.f32 1.5, %v1275
    %v1277 = vmul.f32 %v1272, %v1276
    %vm1278 = vweird.f32 %v1033
    %vm1279 = vweird.f32 %v1272
    %vm1280 = vmor %vm1278, %vm1279
    %v1281 = vsel %vm1280, %v1272, %v1277
    %v1282 = vrsqrt.pop %v1034
    %v1283 = vmul.f32 %v1282, %v1034
    %v1284 = vmul.f32 %v1283, %v1282
    %v1285 = vmul.f32 0.5, %v1284
    %v1286 = vsub.f32 1.5, %v1285
    %v1287 = vmul.f32 %v1282, %v1286
    %vm1288 = vweird.f32 %v1034
    %vm1289 = vweird.f32 %v1282
    %vm1290 = vmor %vm1288, %vm1289
    %v1291 = vsel %vm1290, %v1282, %v1287
    %v1292 = vrsqrt.pop %v1035
    %v1293 = vmul.f32 %v1292, %v1035
    %v1294 = vmul.f32 %v1293, %v1292
    %v1295 = vmul.f32 0.5, %v1294
    %v1296 = vsub.f32 1.5, %v1295
    %v1297 = vmul.f32 %v1292, %v1296
    %vm1298 = vweird.f32 %v1035
    %vm1299 = vweird.f32 %v1292
    %vm1300 = vmor %vm1298, %vm1299
    %v1301 = vsel %vm1300, %v1292, %v1297
    %v1302 = vrsqrt.pop %v1036
    %v1303 = vmul.f32 %v1302, %v1036
    %v1304 = vmul.f32 %v1303, %v1302
    %v1305 = vmul.f32 0.5, %v1304
    %v1306 = vsub.f32 1.5, %v1305
    %v1307 = vmul.f32 %v1302, %v1306
    %vm1308 = vweird.f32 %v1036
    %vm1309 = vweird.f32 %v1302
    %vm1310 = vmor %vm1308, %vm1309
    %v1311 = vsel %vm1310, %v1302, %v1307
    %v1312 = vrsqrt.pop %v1037
    %v1313 = vmul.f32 %v1312, %v1037
    %v1314 = vmul.f32 %v1313, %v1312
    %v1315 = vmul.f32 0.5, %v1314
    %v1316 = vsub.f32 1.5, %v1315
    %v1317 = vmul.f32 %v1312, %v1316
    %vm1318 = vweird.f32 %v1037
    %vm1319 = vweird.f32 %v1312
    %vm1320 = vmor %vm1318, %vm1319
    %v1321 = vsel %vm1320, %v1312, %v1317
    %v1322 = vrsqrt.pop %v1038
    %v1323 = vmul.f32 %v1322, %v1038
    %v1324 = vmul.f32 %v1323, %v1322
    %v1325 = vmul.f32 0.5, %v1324
    %v1326 = vsub.f32 1.5, %v1325
    %v1327 = vmul.f32 %v1322, %v1326
    %vm1328 = vweird.f32 %v1038
    %vm1329 = vweird.f32 %v1322
    %vm1330 = vmor %vm1328, %vm1329
    %v1331 = vsel %vm1330, %v1322, %v1327
    %v1332 = vrsqrt.pop %v1039
    %v1333 = vmul.f32 %v1332, %v1039
    %v1334 = vmul.f32 %v1333, %v1332
    %v1335 = vmul.f32 0.5, %v1334
    %v1336 = vsub.f32 1.5, %v1335
    %v1337 = vmul.f32 %v1332, %v1336
    %vm1338 = vweird.f32 %v1039
    %vm1339 = vweird.f32 %v1332
    %vm1340 = vmor %vm1338, %vm1339
    %v1341 = vsel %vm1340, %v1332, %v1337
    %v1342 = vrsqrt.pop %v1040
    %v1343 = vmul.f32 %v1342, %v1040
    %v1344 = vmul.f32 %v1343, %v1342
    %v1345 = vmul.f32 0.5, %v1344
    %v1346 = vsub.f32 1.5, %v1345
    %v1347 = vmul.f32 %v1342, %v1346
    %vm1348 = vweird.f32 %v1040
    %vm1349 = vweird.f32 %v1342
    %vm1350 = vmor %vm1348, %vm1349
    %v1351 = vsel %vm1350, %v1342, %v1347
    %v1352 = vrsqrt.pop %v1041
    %v1353 = vmul.f32 %v1352, %v1041
    %v1354 = vmul.f32 %v1353, %v1352
    %v1355 = vmul.f32 0.5, %v1354
    %v1356 = vsub.f32 1.5, %v1355
    %v1357 = vmul.f32 %v1352, %v1356
    %vm1358 = vweird.f32 %v1041
    %vm1359 = vweird.f32 %v1352
    %vm1360 = vmor %vm1358, %vm1359
    %v1361 = vsel %vm1360, %v1352, %v1357
    %v1362 = vmul.f32 %v978, %v1051
    %v1363 = vmul.f32 %v979, %v1061
    %v1364 = vmul.f32 %v980, %v1071
    %v1365 = vmul.f32 %v981, %v1081
    %v1366 = vmul.f32 %v982, %v1091
    %v1367 = vmul.f32 %v983, %v1101
    %v1368 = vmul.f32 %v984, %v1111
    %v1369 = vmul.f32 %v985, %v1121
    %v1370 = vmul.f32 %v986, %v1131
    %v1371 = vmul.f32 %v987, %v1141
    %v1372 = vmul.f32 %v988, %v1151
    %v1373 = vmul.f32 %v989, %v1161
    %v1374 = vmul.f32 %v990, %v1171
    %v1375 = vmul.f32 %v991, %v1181
    %v1376 = vmul.f32 %v992, %v1191
    %v1377 = vmul.f32 %v993, %v1201
    %v1378 = vmul.f32 %v994, %v1211
    %v1379 = vmul.f32 %v995, %v1221
    %v1380 = vmul.f32 %v996, %v1231
    %v1381 = vmul.f32 %v997, %v1241
    %v1382 = vmul.f32 %v998, %v1251
    %v1383 = vmul.f32 %v999, %v1261
    %v1384 = vmul.f32 %v1000, %v1271
    %v1385 = vmul.f32 %v1001, %v1281
    %v1386 = vmul.f32 %v1002, %v1291
    %v1387 = vmul.f32 %v1003, %v1301
    %v1388 = vmul.f32 %v1004, %v1311
    %v1389 = vmul.f32 %v1005, %v1321
    %v1390 = vmul.f32 %v1006, %v1331
    %v1391 = vmul.f32 %v1007, %v1341
    %v1392 = vmul.f32 %v1008, %v1351
    %v1393 = vmul.f32 %v1009, %v1361
    %v1394 = vld [vmem:[%s4] sm:$0x1]
    %v1396 = vperm.slane %v1394, 0
    %v1398 = vmul.f32 %v1362, %v1396
    %v1399 = vmul.f32 %v1363, %v1396
    %v1400 = vmul.f32 %v1364, %v1396
    %v1401 = vmul.f32 %v1365, %v1396
    %v1402 = vmul.f32 %v1366, %v1396
    %v1403 = vmul.f32 %v1367, %v1396
    %v1404 = vmul.f32 %v1368, %v1396
    %v1405 = vmul.f32 %v1369, %v1396
    %v1406 = vmul.f32 %v1370, %v1396
    %v1407 = vmul.f32 %v1371, %v1396
    %v1408 = vmul.f32 %v1372, %v1396
    %v1409 = vmul.f32 %v1373, %v1396
    %v1410 = vmul.f32 %v1374, %v1396
    %v1411 = vmul.f32 %v1375, %v1396
    %v1412 = vmul.f32 %v1376, %v1396
    %v1413 = vmul.f32 %v1377, %v1396
    %v1414 = vmul.f32 %v1378, %v1396
    %v1415 = vmul.f32 %v1379, %v1396
    %v1416 = vmul.f32 %v1380, %v1396
    %v1417 = vmul.f32 %v1381, %v1396
    %v1418 = vmul.f32 %v1382, %v1396
    %v1419 = vmul.f32 %v1383, %v1396
    %v1420 = vmul.f32 %v1384, %v1396
    %v1421 = vmul.f32 %v1385, %v1396
    %v1422 = vmul.f32 %v1386, %v1396
    %v1423 = vmul.f32 %v1387, %v1396
    %v1424 = vmul.f32 %v1388, %v1396
    %v1425 = vmul.f32 %v1389, %v1396
    %v1426 = vmul.f32 %v1390, %v1396
    %v1427 = vmul.f32 %v1391, %v1396
    %v1428 = vmul.f32 %v1392, %v1396
    %v1429 = vmul.f32 %v1393, %v1396
    %v1430 = vld [vmem:[%s5] sm:$0x1]
    %v1432 = vperm.slane %v1430, 0
    %v1434 = vadd.f32 %v1398, %v1432
    %v1435 = vadd.f32 %v1399, %v1432
    %v1436 = vadd.f32 %v1400, %v1432
    %v1437 = vadd.f32 %v1401, %v1432
    %v1438 = vadd.f32 %v1402, %v1432
    %v1439 = vadd.f32 %v1403, %v1432
    %v1440 = vadd.f32 %v1404, %v1432
    %v1441 = vadd.f32 %v1405, %v1432
    %v1442 = vadd.f32 %v1406, %v1432
    %v1443 = vadd.f32 %v1407, %v1432
    %v1444 = vadd.f32 %v1408, %v1432
    %v1445 = vadd.f32 %v1409, %v1432
    %v1446 = vadd.f32 %v1410, %v1432
    %v1447 = vadd.f32 %v1411, %v1432
    %v1448 = vadd.f32 %v1412, %v1432
    %v1449 = vadd.f32 %v1413, %v1432
    %v1450 = vadd.f32 %v1414, %v1432
    %v1451 = vadd.f32 %v1415, %v1432
    %v1452 = vadd.f32 %v1416, %v1432
    %v1453 = vadd.f32 %v1417, %v1432
    %v1454 = vadd.f32 %v1418, %v1432
    %v1455 = vadd.f32 %v1419, %v1432
    %v1456 = vadd.f32 %v1420, %v1432
    %v1457 = vadd.f32 %v1421, %v1432
    %v1458 = vadd.f32 %v1422, %v1432
    %v1459 = vadd.f32 %v1423, %v1432
    %v1460 = vadd.f32 %v1424, %v1432
    %v1461 = vadd.f32 %v1425, %v1432
    %v1462 = vadd.f32 %v1426, %v1432
    %v1463 = vadd.f32 %v1427, %v1432
    %v1464 = vadd.f32 %v1428, %v1432
    %v1465 = vadd.f32 %v1429, %v1432
    %v1466 = vpack.c.bf16 %v1435, %v1434
    %v1467 = vpack.c.bf16 %v1437, %v1436
    %v1468 = vpack.c.bf16 %v1439, %v1438
    %v1469 = vpack.c.bf16 %v1441, %v1440
    %v1470 = vpack.c.bf16 %v1443, %v1442
    %v1471 = vpack.c.bf16 %v1445, %v1444
    %v1472 = vpack.c.bf16 %v1447, %v1446
    %v1473 = vpack.c.bf16 %v1449, %v1448
    %v1474 = vpack.c.bf16 %v1451, %v1450
    %v1475 = vpack.c.bf16 %v1453, %v1452
    %v1476 = vpack.c.bf16 %v1455, %v1454
    %v1477 = vpack.c.bf16 %v1457, %v1456
    %v1478 = vpack.c.bf16 %v1459, %v1458
    %v1479 = vpack.c.bf16 %v1461, %v1460
    %v1480 = vpack.c.bf16 %v1463, %v1462
    %v1481 = vpack.c.bf16 %v1465, %v1464
    %v1482 = vld [vmem:[#allocation8] sm:$0xf]
    %v1483 = vld [vmem:[#allocation8 + $0x4] sm:$0xf]
    %v1484 = vld [vmem:[#allocation8 + $0x8] sm:$0xf]
    %v1485 = vld [vmem:[#allocation8 + $0xc] sm:$0xf]
    %v1486 = vld [vmem:[#allocation8 + $0x10] sm:$0xf]
    %v1487 = vld [vmem:[#allocation8 + $0x14] sm:$0xf]
    %v1488 = vld [vmem:[#allocation8 + $0x18] sm:$0xf]
    %v1489 = vld [vmem:[#allocation8 + $0x1c] sm:$0xf]
    %v1490 = vld [vmem:[#allocation8 + $0x20] sm:$0xf]
    %v1491 = vld [vmem:[#allocation8 + $0x24] sm:$0xf]
    %v1492 = vld [vmem:[#allocation8 + $0x28] sm:$0xf]
    %v1493 = vld [vmem:[#allocation8 + $0x2c] sm:$0xf]
    %v1494 = vld [vmem:[#allocation8 + $0x30] sm:$0xf]
    %v1495 = vld [vmem:[#allocation8 + $0x34] sm:$0xf]
    %v1496 = vld [vmem:[#allocation8 + $0x38] sm:$0xf]
    %v1497 = vld [vmem:[#allocation8 + $0x3c] sm:$0xf]
    %v1514 = vunpack.c.l.b16 %v1482
    %v1515 = vunpack.c.l.b16 %v1483
    %v1516 = vunpack.c.l.b16 %v1484
    %v1517 = vunpack.c.l.b16 %v1485
    %v1518 = vunpack.c.l.b16 %v1486
    %v1519 = vunpack.c.l.b16 %v1487
    %v1520 = vunpack.c.l.b16 %v1488
    %v1521 = vunpack.c.l.b16 %v1489
    %v1522 = vunpack.c.l.b16 %v1490
    %v1523 = vunpack.c.l.b16 %v1491
    %v1524 = vunpack.c.l.b16 %v1492
    %v1525 = vunpack.c.l.b16 %v1493
    %v1526 = vunpack.c.l.b16 %v1494
    %v1527 = vunpack.c.l.b16 %v1495
    %v1528 = vunpack.c.l.b16 %v1496
    %v1529 = vunpack.c.l.b16 %v1497
    %v1530 = vpack.c.b16 %v1515, %v1514
    %v1531 = vpack.c.b16 %v1517, %v1516
    %v1532 = vpack.c.b16 %v1519, %v1518
    %v1533 = vpack.c.b16 %v1521, %v1520
    %v1534 = vpack.c.b16 %v1523, %v1522
    %v1535 = vpack.c.b16 %v1525, %v1524
    %v1536 = vpack.c.b16 %v1527, %v1526
    %v1537 = vpack.c.b16 %v1529, %v1528
    %1546 = vmatpush.bf16.msra.mxu0 %v1537
    %1547 = vmatpush.bf16.msra.mxu0 %v1536
    %1548 = vmatpush.bf16.msra.mxu0 %v1535
    %1549 = vmatpush.bf16.msra.mxu0 %v1534
    %1550 = vmatpush.bf16.msra.mxu0 %v1533
    %1551 = vmatpush.bf16.msra.mxu0 %v1532
    %1552 = vmatpush.bf16.msra.mxu0 %v1531
    %1553 = vmatpush.bf16.msra.mxu0 %v1530
    %1554 = vmatmul.bf16.gmra.mxu0 %v1466
    %v1555 = vpop.f32.mrf.mxu0
    %v1556 = vadd.f32 0.0, %v1555
    %v1557 = vpop.f32.mrf.mxu0
    %v1558 = vadd.f32 0.0, %v1557
    %1559 = vmatmul.bf16.gmra.mxu0 %v1467
    %v1560 = vpop.f32.mrf.mxu0
    %v1561 = vadd.f32 0.0, %v1560
    %v1562 = vpop.f32.mrf.mxu0
    %v1563 = vadd.f32 0.0, %v1562
    %1564 = vmatmul.bf16.gmra.mxu0 %v1468
    %v1565 = vpop.f32.mrf.mxu0
    %v1566 = vadd.f32 0.0, %v1565
    %v1567 = vpop.f32.mrf.mxu0
    %v1568 = vadd.f32 0.0, %v1567
    %1569 = vmatmul.bf16.gmra.mxu0 %v1469
    %v1570 = vpop.f32.mrf.mxu0
    %v1571 = vadd.f32 0.0, %v1570
    %v1572 = vpop.f32.mrf.mxu0
    %v1573 = vadd.f32 0.0, %v1572
    %1574 = vmatmul.bf16.gmra.mxu0 %v1470
    %v1575 = vpop.f32.mrf.mxu0
    %v1576 = vadd.f32 0.0, %v1575
    %v1577 = vpop.f32.mrf.mxu0
    %v1578 = vadd.f32 0.0, %v1577
    %1579 = vmatmul.bf16.gmra.mxu0 %v1471
    %v1580 = vpop.f32.mrf.mxu0
    %v1581 = vadd.f32 0.0, %v1580
    %v1582 = vpop.f32.mrf.mxu0
    %v1583 = vadd.f32 0.0, %v1582
    %1584 = vmatmul.bf16.gmra.mxu0 %v1472
    %v1585 = vpop.f32.mrf.mxu0
    %v1586 = vadd.f32 0.0, %v1585
    %v1587 = vpop.f32.mrf.mxu0
    %v1588 = vadd.f32 0.0, %v1587
    %1589 = vmatmul.bf16.gmra.mxu0 %v1473
    %v1590 = vpop.f32.mrf.mxu0
    %v1591 = vadd.f32 0.0, %v1590
    %v1592 = vpop.f32.mrf.mxu0
    %v1593 = vadd.f32 0.0, %v1592
    %1594 = vmatmul.bf16.gmra.mxu0 %v1474
    %v1595 = vpop.f32.mrf.mxu0
    %v1596 = vadd.f32 0.0, %v1595
    %v1597 = vpop.f32.mrf.mxu0
    %v1598 = vadd.f32 0.0, %v1597
    %1599 = vmatmul.bf16.gmra.mxu0 %v1475
    %v1600 = vpop.f32.mrf.mxu0
    %v1601 = vadd.f32 0.0, %v1600
    %v1602 = vpop.f32.mrf.mxu0
    %v1603 = vadd.f32 0.0, %v1602
    %1604 = vmatmul.bf16.gmra.mxu0 %v1476
    %v1605 = vpop.f32.mrf.mxu0
    %v1606 = vadd.f32 0.0, %v1605
    %v1607 = vpop.f32.mrf.mxu0
    %v1608 = vadd.f32 0.0, %v1607
    %1609 = vmatmul.bf16.gmra.mxu0 %v1477
    %v1610 = vpop.f32.mrf.mxu0
    %v1611 = vadd.f32 0.0, %v1610
    %v1612 = vpop.f32.mrf.mxu0
    %v1613 = vadd.f32 0.0, %v1612
    %1614 = vmatmul.bf16.gmra.mxu0 %v1478
    %v1615 = vpop.f32.mrf.mxu0
    %v1616 = vadd.f32 0.0, %v1615
    %v1617 = vpop.f32.mrf.mxu0
    %v1618 = vadd.f32 0.0, %v1617
    %1619 = vmatmul.bf16.gmra.mxu0 %v1479
    %v1620 = vpop.f32.mrf.mxu0
    %v1621 = vadd.f32 0.0, %v1620
    %v1622 = vpop.f32.mrf.mxu0
    %v1623 = vadd.f32 0.0, %v1622
    %1624 = vmatmul.bf16.gmra.mxu0 %v1480
    %v1625 = vpop.f32.mrf.mxu0
    %v1626 = vadd.f32 0.0, %v1625
    %v1627 = vpop.f32.mrf.mxu0
    %v1628 = vadd.f32 0.0, %v1627
    %1629 = vmatmul.bf16.gmra.mxu0 %v1481
    %v1630 = vpop.f32.mrf.mxu0
    %v1631 = vadd.f32 0.0, %v1630
    %v1632 = vpop.f32.mrf.mxu0
    %v1633 = vadd.f32 0.0, %v1632
    %1634 = vdwg.mxu0
    %v1635 = vpack.c.bf16 %v1556, %v1556
    %v1636 = vpack.c.bf16 %v1558, %v1558
    %v1637 = vpack.c.bf16 %v1561, %v1561
    %v1638 = vpack.c.bf16 %v1563, %v1563
    %v1639 = vpack.c.bf16 %v1566, %v1566
    %v1640 = vpack.c.bf16 %v1568, %v1568
    %v1641 = vpack.c.bf16 %v1571, %v1571
    %v1642 = vpack.c.bf16 %v1573, %v1573
    %v1643 = vpack.c.bf16 %v1576, %v1576
    %v1644 = vpack.c.bf16 %v1578, %v1578
    %v1645 = vpack.c.bf16 %v1581, %v1581
    %v1646 = vpack.c.bf16 %v1583, %v1583
    %v1647 = vpack.c.bf16 %v1586, %v1586
    %v1648 = vpack.c.bf16 %v1588, %v1588
    %v1649 = vpack.c.bf16 %v1591, %v1591
    %v1650 = vpack.c.bf16 %v1593, %v1593
    %v1651 = vpack.c.bf16 %v1596, %v1596
    %v1652 = vpack.c.bf16 %v1598, %v1598
    %v1653 = vpack.c.bf16 %v1601, %v1601
    %v1654 = vpack.c.bf16 %v1603, %v1603
    %v1655 = vpack.c.bf16 %v1606, %v1606
    %v1656 = vpack.c.bf16 %v1608, %v1608
    %v1657 = vpack.c.bf16 %v1611, %v1611
    %v1658 = vpack.c.bf16 %v1613, %v1613
    %v1659 = vpack.c.bf16 %v1616, %v1616
    %v1660 = vpack.c.bf16 %v1618, %v1618
    %v1661 = vpack.c.bf16 %v1621, %v1621
    %v1662 = vpack.c.bf16 %v1623, %v1623
    %v1663 = vpack.c.bf16 %v1626, %v1626
    %v1664 = vpack.c.bf16 %v1628, %v1628
    %v1665 = vpack.c.bf16 %v1631, %v1631
    %v1666 = vpack.c.bf16 %v1633, %v1633
    %v1683 = vunpack.c.l.b16 %v1635
    %v1684 = vunpack.c.l.b16 %v1636
    %v1685 = vunpack.c.l.b16 %v1637
    %v1686 = vunpack.c.l.b16 %v1638
    %v1687 = vunpack.c.l.b16 %v1639
    %v1688 = vunpack.c.l.b16 %v1640
    %v1689 = vunpack.c.l.b16 %v1641
    %v1690 = vunpack.c.l.b16 %v1642
    %v1691 = vunpack.c.l.b16 %v1643
    %v1692 = vunpack.c.l.b16 %v1644
    %v1693 = vunpack.c.l.b16 %v1645
    %v1694 = vunpack.c.l.b16 %v1646
    %v1695 = vunpack.c.l.b16 %v1647
    %v1696 = vunpack.c.l.b16 %v1648
    %v1697 = vunpack.c.l.b16 %v1649
    %v1698 = vunpack.c.l.b16 %v1650
    %v1699 = vpack.c.b16 %v1684, %v1683
    %v1700 = vpack.c.b16 %v1686, %v1685
    %v1701 = vpack.c.b16 %v1688, %v1687
    %v1702 = vpack.c.b16 %v1690, %v1689
    %v1703 = vpack.c.b16 %v1692, %v1691
    %v1704 = vpack.c.b16 %v1694, %v1693
    %v1705 = vpack.c.b16 %v1696, %v1695
    %v1706 = vpack.c.b16 %v1698, %v1697
    %1715 = vmatpush.bf16.msra.mxu0 %v1706
    %1716 = vmatpush.bf16.msra.mxu0 %v1705
    %1717 = vmatpush.bf16.msra.mxu0 %v1704
    %1718 = vmatpush.bf16.msra.mxu0 %v1703
    %1719 = vmatpush.bf16.msra.mxu0 %v1702
    %1720 = vmatpush.bf16.msra.mxu0 %v1701
    %1721 = vmatpush.bf16.msra.mxu0 %v1700
    %1722 = vmatpush.bf16.msra.mxu0 %v1699
    %1723 = vmatmul.bf16.gmra.mxu0 %v195
    %v1724 = vpop.f32.mrf.mxu0
    %v1725 = vadd.f32 0.0, %v1724
    %v1726 = vpop.f32.mrf.mxu0
    %v1727 = vadd.f32 0.0, %v1726
    %1728 = vmatmul.bf16.gmra.mxu0 %v196
    %v1729 = vpop.f32.mrf.mxu0
    %v1730 = vadd.f32 0.0, %v1729
    %v1731 = vpop.f32.mrf.mxu0
    %v1732 = vadd.f32 0.0, %v1731
    %1733 = vmatmul.bf16.gmra.mxu0 %v197
    %v1734 = vpop.f32.mrf.mxu0
    %v1735 = vadd.f32 0.0, %v1734
    %v1736 = vpop.f32.mrf.mxu0
    %v1737 = vadd.f32 0.0, %v1736
    %1738 = vmatmul.bf16.gmra.mxu0 %v198
    %v1739 = vpop.f32.mrf.mxu0
    %v1740 = vadd.f32 0.0, %v1739
    %v1741 = vpop.f32.mrf.mxu0
    %v1742 = vadd.f32 0.0, %v1741
    %1743 = vmatmul.bf16.gmra.mxu0 %v199
    %v1744 = vpop.f32.mrf.mxu0
    %v1745 = vadd.f32 0.0, %v1744
    %v1746 = vpop.f32.mrf.mxu0
    %v1747 = vadd.f32 0.0, %v1746
    %1748 = vmatmul.bf16.gmra.mxu0 %v200
    %v1749 = vpop.f32.mrf.mxu0
    %v1750 = vadd.f32 0.0, %v1749
    %v1751 = vpop.f32.mrf.mxu0
    %v1752 = vadd.f32 0.0, %v1751
    %1753 = vmatmul.bf16.gmra.mxu0 %v201
    %v1754 = vpop.f32.mrf.mxu0
    %v1755 = vadd.f32 0.0, %v1754
    %v1756 = vpop.f32.mrf.mxu0
    %v1757 = vadd.f32 0.0, %v1756
    %1758 = vmatmul.bf16.gmra.mxu0 %v202
    %v1759 = vpop.f32.mrf.mxu0
    %v1760 = vadd.f32 0.0, %v1759
    %v1761 = vpop.f32.mrf.mxu0
    %v1762 = vadd.f32 0.0, %v1761
    %1763 = vdwg.mxu0
    %v1780 = vunpack.c.l.b16 %v1651
    %v1781 = vunpack.c.l.b16 %v1652
    %v1782 = vunpack.c.l.b16 %v1653
    %v1783 = vunpack.c.l.b16 %v1654
    %v1784 = vunpack.c.l.b16 %v1655
    %v1785 = vunpack.c.l.b16 %v1656
    %v1786 = vunpack.c.l.b16 %v1657
    %v1787 = vunpack.c.l.b16 %v1658
    %v1788 = vunpack.c.l.b16 %v1659
    %v1789 = vunpack.c.l.b16 %v1660
    %v1790 = vunpack.c.l.b16 %v1661
    %v1791 = vunpack.c.l.b16 %v1662
    %v1792 = vunpack.c.l.b16 %v1663
    %v1793 = vunpack.c.l.b16 %v1664
    %v1794 = vunpack.c.l.b16 %v1665
    %v1795 = vunpack.c.l.b16 %v1666
    %v1796 = vpack.c.b16 %v1781, %v1780
    %v1797 = vpack.c.b16 %v1783, %v1782
    %v1798 = vpack.c.b16 %v1785, %v1784
    %v1799 = vpack.c.b16 %v1787, %v1786
    %v1800 = vpack.c.b16 %v1789, %v1788
    %v1801 = vpack.c.b16 %v1791, %v1790
    %v1802 = vpack.c.b16 %v1793, %v1792
    %v1803 = vpack.c.b16 %v1795, %v1794
    %1812 = vmatpush.bf16.msra.mxu0 %v1803
    %1813 = vmatpush.bf16.msra.mxu0 %v1802
    %1814 = vmatpush.bf16.msra.mxu0 %v1801
    %1815 = vmatpush.bf16.msra.mxu0 %v1800
    %1816 = vmatpush.bf16.msra.mxu0 %v1799
    %1817 = vmatpush.bf16.msra.mxu0 %v1798
    %1818 = vmatpush.bf16.msra.mxu0 %v1797
    %1819 = vmatpush.bf16.msra.mxu0 %v1796
    %1820 = vmatmul.bf16.gmra.mxu0 %v340
    %v1821 = vpop.f32.mrf.mxu0
    %v1822 = vadd.f32 0.0, %v1821
    %v1823 = vpop.f32.mrf.mxu0
    %v1824 = vadd.f32 0.0, %v1823
    %1825 = vmatmul.bf16.gmra.mxu0 %v341
    %v1826 = vpop.f32.mrf.mxu0
    %v1827 = vadd.f32 0.0, %v1826
    %v1828 = vpop.f32.mrf.mxu0
    %v1829 = vadd.f32 0.0, %v1828
    %1830 = vmatmul.bf16.gmra.mxu0 %v342
    %v1831 = vpop.f32.mrf.mxu0
    %v1832 = vadd.f32 0.0, %v1831
    %v1833 = vpop.f32.mrf.mxu0
    %v1834 = vadd.f32 0.0, %v1833
    %1835 = vmatmul.bf16.gmra.mxu0 %v343
    %v1836 = vpop.f32.mrf.mxu0
    %v1837 = vadd.f32 0.0, %v1836
    %v1838 = vpop.f32.mrf.mxu0
    %v1839 = vadd.f32 0.0, %v1838
    %1840 = vmatmul.bf16.gmra.mxu0 %v344
    %v1841 = vpop.f32.mrf.mxu0
    %v1842 = vadd.f32 0.0, %v1841
    %v1843 = vpop.f32.mrf.mxu0
    %v1844 = vadd.f32 0.0, %v1843
    %1845 = vmatmul.bf16.gmra.mxu0 %v345
    %v1846 = vpop.f32.mrf.mxu0
    %v1847 = vadd.f32 0.0, %v1846
    %v1848 = vpop.f32.mrf.mxu0
    %v1849 = vadd.f32 0.0, %v1848
    %1850 = vmatmul.bf16.gmra.mxu0 %v346
    %v1851 = vpop.f32.mrf.mxu0
    %v1852 = vadd.f32 0.0, %v1851
    %v1853 = vpop.f32.mrf.mxu0
    %v1854 = vadd.f32 0.0, %v1853
    %1855 = vmatmul.bf16.gmra.mxu0 %v347
    %v1856 = vpop.f32.mrf.mxu0
    %v1857 = vadd.f32 0.0, %v1856
    %v1858 = vpop.f32.mrf.mxu0
    %v1859 = vadd.f32 0.0, %v1858
    %1860 = vdwg.mxu0
    %v1861 = vld [vmem:[%s7] sm:$0x1]
    %v1863 = vperm.slane %v1861, 0
    %v1865 = vadd.f32 %v1725, %v1863
    %v1866 = vadd.f32 %v1727, %v1863
    %v1867 = vadd.f32 %v1730, %v1863
    %v1868 = vadd.f32 %v1732, %v1863
    %v1869 = vadd.f32 %v1735, %v1863
    %v1870 = vadd.f32 %v1737, %v1863
    %v1871 = vadd.f32 %v1740, %v1863
    %v1872 = vadd.f32 %v1742, %v1863
    %v1873 = vadd.f32 %v1745, %v1863
    %v1874 = vadd.f32 %v1747, %v1863
    %v1875 = vadd.f32 %v1750, %v1863
    %v1876 = vadd.f32 %v1752, %v1863
    %v1877 = vadd.f32 %v1755, %v1863
    %v1878 = vadd.f32 %v1757, %v1863
    %v1879 = vadd.f32 %v1760, %v1863
    %v1880 = vadd.f32 %v1762, %v1863
    %v1881 = vadd.f32 %v1822, %v1863
    %v1882 = vadd.f32 %v1824, %v1863
    %v1883 = vadd.f32 %v1827, %v1863
    %v1884 = vadd.f32 %v1829, %v1863
    %v1885 = vadd.f32 %v1832, %v1863
    %v1886 = vadd.f32 %v1834, %v1863
    %v1887 = vadd.f32 %v1837, %v1863
    %v1888 = vadd.f32 %v1839, %v1863
    %v1889 = vadd.f32 %v1842, %v1863
    %v1890 = vadd.f32 %v1844, %v1863
    %v1891 = vadd.f32 %v1847, %v1863
    %v1892 = vadd.f32 %v1849, %v1863
    %v1893 = vadd.f32 %v1852, %v1863
    %v1894 = vadd.f32 %v1854, %v1863
    %v1895 = vadd.f32 %v1857, %v1863
    %v1896 = vadd.f32 %v1859, %v1863
    %1897 = vadd.xlane.f32.xlu0 %v1865
    %v1898 = vpop.xlane.xlu0 %1897
    %1899 = vadd.xlane.f32.xlu0 %v1866
    %v1900 = vpop.xlane.xlu0 %1899
    %1901 = vadd.xlane.f32.xlu0 %v1867
    %v1902 = vpop.xlane.xlu0 %1901
    %1903 = vadd.xlane.f32.xlu0 %v1868
    %v1904 = vpop.xlane.xlu0 %1903
    %1905 = vadd.xlane.f32.xlu0 %v1869
    %v1906 = vpop.xlane.xlu0 %1905
    %1907 = vadd.xlane.f32.xlu0 %v1870
    %v1908 = vpop.xlane.xlu0 %1907
    %1909 = vadd.xlane.f32.xlu0 %v1871
    %v1910 = vpop.xlane.xlu0 %1909
    %1911 = vadd.xlane.f32.xlu0 %v1872
    %v1912 = vpop.xlane.xlu0 %1911
    %1913 = vadd.xlane.f32.xlu0 %v1873
    %v1914 = vpop.xlane.xlu0 %1913
    %1915 = vadd.xlane.f32.xlu0 %v1874
    %v1916 = vpop.xlane.xlu0 %1915
    %1917 = vadd.xlane.f32.xlu0 %v1875
    %v1918 = vpop.xlane.xlu0 %1917
    %1919 = vadd.xlane.f32.xlu0 %v1876
    %v1920 = vpop.xlane.xlu0 %1919
    %1921 = vadd.xlane.f32.xlu0 %v1877
    %v1922 = vpop.xlane.xlu0 %1921
    %1923 = vadd.xlane.f32.xlu0 %v1878
    %v1924 = vpop.xlane.xlu0 %1923
    %1925 = vadd.xlane.f32.xlu0 %v1879
    %v1926 = vpop.xlane.xlu0 %1925
    %1927 = vadd.xlane.f32.xlu0 %v1880
    %v1928 = vpop.xlane.xlu0 %1927
    %1929 = vadd.xlane.f32.xlu0 %v1881
    %v1930 = vpop.xlane.xlu0 %1929
    %1931 = vadd.xlane.f32.xlu0 %v1882
    %v1932 = vpop.xlane.xlu0 %1931
    %1933 = vadd.xlane.f32.xlu0 %v1883
    %v1934 = vpop.xlane.xlu0 %1933
    %1935 = vadd.xlane.f32.xlu0 %v1884
    %v1936 = vpop.xlane.xlu0 %1935
    %1937 = vadd.xlane.f32.xlu0 %v1885
    %v1938 = vpop.xlane.xlu0 %1937
    %1939 = vadd.xlane.f32.xlu0 %v1886
    %v1940 = vpop.xlane.xlu0 %1939
    %1941 = vadd.xlane.f32.xlu0 %v1887
    %v1942 = vpop.xlane.xlu0 %1941
    %1943 = vadd.xlane.f32.xlu0 %v1888
    %v1944 = vpop.xlane.xlu0 %1943
    %1945 = vadd.xlane.f32.xlu0 %v1889
    %v1946 = vpop.xlane.xlu0 %1945
    %1947 = vadd.xlane.f32.xlu0 %v1890
    %v1948 = vpop.xlane.xlu0 %1947
    %1949 = vadd.xlane.f32.xlu0 %v1891
    %v1950 = vpop.xlane.xlu0 %1949
    %1951 = vadd.xlane.f32.xlu0 %v1892
    %v1952 = vpop.xlane.xlu0 %1951
    %1953 = vadd.xlane.f32.xlu0 %v1893
    %v1954 = vpop.xlane.xlu0 %1953
    %1955 = vadd.xlane.f32.xlu0 %v1894
    %v1956 = vpop.xlane.xlu0 %1955
    %1957 = vadd.xlane.f32.xlu0 %v1895
    %v1958 = vpop.xlane.xlu0 %1957
    %1959 = vadd.xlane.f32.xlu0 %v1896
    %v1960 = vpop.xlane.xlu0 %1959
    %v1961 = vmul.f32 %v1898, 0.0625
    %v1962 = vmul.f32 %v1900, 0.0625
    %v1963 = vmul.f32 %v1902, 0.0625
    %v1964 = vmul.f32 %v1904, 0.0625
    %v1965 = vmul.f32 %v1906, 0.0625
    %v1966 = vmul.f32 %v1908, 0.0625
    %v1967 = vmul.f32 %v1910, 0.0625
    %v1968 = vmul.f32 %v1912, 0.0625
    %v1969 = vmul.f32 %v1914, 0.0625
    %v1970 = vmul.f32 %v1916, 0.0625
    %v1971 = vmul.f32 %v1918, 0.0625
    %v1972 = vmul.f32 %v1920, 0.0625
    %v1973 = vmul.f32 %v1922, 0.0625
    %v1974 = vmul.f32 %v1924, 0.0625
    %v1975 = vmul.f32 %v1926, 0.0625
    %v1976 = vmul.f32 %v1928, 0.0625
    %v1977 = vmul.f32 %v1930, 0.0625
    %v1978 = vmul.f32 %v1932, 0.0625
    %v1979 = vmul.f32 %v1934, 0.0625
    %v1980 = vmul.f32 %v1936, 0.0625
    %v1981 = vmul.f32 %v1938, 0.0625
    %v1982 = vmul.f32 %v1940, 0.0625
    %v1983 = vmul.f32 %v1942, 0.0625
    %v1984 = vmul.f32 %v1944, 0.0625
    %v1985 = vmul.f32 %v1946, 0.0625
    %v1986 = vmul.f32 %v1948, 0.0625
    %v1987 = vmul.f32 %v1950, 0.0625
    %v1988 = vmul.f32 %v1952, 0.0625
    %v1989 = vmul.f32 %v1954, 0.0625
    %v1990 = vmul.f32 %v1956, 0.0625
    %v1991 = vmul.f32 %v1958, 0.0625
    %v1992 = vmul.f32 %v1960, 0.0625
    %v1993 = vmul.f32 %v1865, %v1865
    %v1994 = vmul.f32 %v1866, %v1866
    %v1995 = vmul.f32 %v1867, %v1867
    %v1996 = vmul.f32 %v1868, %v1868
    %v1997 = vmul.f32 %v1869, %v1869
    %v1998 = vmul.f32 %v1870, %v1870
    %v1999 = vmul.f32 %v1871, %v1871
    %v2000 = vmul.f32 %v1872, %v1872
    %v2001 = vmul.f32 %v1873, %v1873
    %v2002 = vmul.f32 %v1874, %v1874
    %v2003 = vmul.f32 %v1875, %v1875
    %v2004 = vmul.f32 %v1876, %v1876
    %v2005 = vmul.f32 %v1877, %v1877
    %v2006 = vmul.f32 %v1878, %v1878
    %v2007 = vmul.f32 %v1879, %v1879
    %v2008 = vmul.f32 %v1880, %v1880
    %v2009 = vmul.f32 %v1881, %v1881
    %v2010 = vmul.f32 %v1882, %v1882
    %v2011 = vmul.f32 %v1883, %v1883
    %v2012 = vmul.f32 %v1884, %v1884
    %v2013 = vmul.f32 %v1885, %v1885
    %v2014 = vmul.f32 %v1886, %v1886
    %v2015 = vmul.f32 %v1887, %v1887
    %v2016 = vmul.f32 %v1888, %v1888
    %v2017 = vmul.f32 %v1889, %v1889
    %v2018 = vmul.f32 %v1890, %v1890
    %v2019 = vmul.f32 %v1891, %v1891
    %v2020 = vmul.f32 %v1892, %v1892
    %v2021 = vmul.f32 %v1893, %v1893
    %v2022 = vmul.f32 %v1894, %v1894
    %v2023 = vmul.f32 %v1895, %v1895
    %v2024 = vmul.f32 %v1896, %v1896
    %2025 = vadd.xlane.f32.xlu0 %v1993
    %v2026 = vpop.xlane.xlu0 %2025
    %2027 = vadd.xlane.f32.xlu0 %v1994
    %v2028 = vpop.xlane.xlu0 %2027
    %2029 = vadd.xlane.f32.xlu0 %v1995
    %v2030 = vpop.xlane.xlu0 %2029
    %2031 = vadd.xlane.f32.xlu0 %v1996
    %v2032 = vpop.xlane.xlu0 %2031
    %2033 = vadd.xlane.f32.xlu0 %v1997
    %v2034 = vpop.xlane.xlu0 %2033
    %2035 = vadd.xlane.f32.xlu0 %v1998
    %v2036 = vpop.xlane.xlu0 %2035
    %2037 = vadd.xlane.f32.xlu0 %v1999
    %v2038 = vpop.xlane.xlu0 %2037
    %2039 = vadd.xlane.f32.xlu0 %v2000
    %v2040 = vpop.xlane.xlu0 %2039
    %2041 = vadd.xlane.f32.xlu0 %v2001
    %v2042 = vpop.xlane.xlu0 %2041
    %2043 = vadd.xlane.f32.xlu0 %v2002
    %v2044 = vpop.xlane.xlu0 %2043
    %2045 = vadd.xlane.f32.xlu0 %v2003
    %v2046 = vpop.xlane.xlu0 %2045
    %2047 = vadd.xlane.f32.xlu0 %v2004
    %v2048 = vpop.xlane.xlu0 %2047
    %2049 = vadd.xlane.f32.xlu0 %v2005
    %v2050 = vpop.xlane.xlu0 %2049
    %2051 = vadd.xlane.f32.xlu0 %v2006
    %v2052 = vpop.xlane.xlu0 %2051
    %2053 = vadd.xlane.f32.xlu0 %v2007
    %v2054 = vpop.xlane.xlu0 %2053
    %2055 = vadd.xlane.f32.xlu0 %v2008
    %v2056 = vpop.xlane.xlu0 %2055
    %2057 = vadd.xlane.f32.xlu0 %v2009
    %v2058 = vpop.xlane.xlu0 %2057
    %2059 = vadd.xlane.f32.xlu0 %v2010
    %v2060 = vpop.xlane.xlu0 %2059
    %2061 = vadd.xlane.f32.xlu0 %v2011
    %v2062 = vpop.xlane.xlu0 %2061
    %2063 = vadd.xlane.f32.xlu0 %v2012
    %v2064 = vpop.xlane.xlu0 %2063
    %2065 = vadd.xlane.f32.xlu0 %v2013
    %v2066 = vpop.xlane.xlu0 %2065
    %2067 = vadd.xlane.f32.xlu0 %v2014
    %v2068 = vpop.xlane.xlu0 %2067
    %2069 = vadd.xlane.f32.xlu0 %v2015
    %v2070 = vpop.xlane.xlu0 %2069
    %2071 = vadd.xlane.f32.xlu0 %v2016
    %v2072 = vpop.xlane.xlu0 %2071
    %2073 = vadd.xlane.f32.xlu0 %v2017
    %v2074 = vpop.xlane.xlu0 %2073
    %2075 = vadd.xlane.f32.xlu0 %v2018
    %v2076 = vpop.xlane.xlu0 %2075
    %2077 = vadd.xlane.f32.xlu0 %v2019
    %v2078 = vpop.xlane.xlu0 %2077
    %2079 = vadd.xlane.f32.xlu0 %v2020
    %v2080 = vpop.xlane.xlu0 %2079
    %2081 = vadd.xlane.f32.xlu0 %v2021
    %v2082 = vpop.xlane.xlu0 %2081
    %2083 = vadd.xlane.f32.xlu0 %v2022
    %v2084 = vpop.xlane.xlu0 %2083
    %2085 = vadd.xlane.f32.xlu0 %v2023
    %v2086 = vpop.xlane.xlu0 %2085
    %2087 = vadd.xlane.f32.xlu0 %v2024
    %v2088 = vpop.xlane.xlu0 %2087
    %v2089 = vmul.f32 %v2026, 0.0625
    %v2090 = vmul.f32 %v2028, 0.0625
    %v2091 = vmul.f32 %v2030, 0.0625
    %v2092 = vmul.f32 %v2032, 0.0625
    %v2093 = vmul.f32 %v2034, 0.0625
    %v2094 = vmul.f32 %v2036, 0.0625
    %v2095 = vmul.f32 %v2038, 0.0625
    %v2096 = vmul.f32 %v2040, 0.0625
    %v2097 = vmul.f32 %v2042, 0.0625
    %v2098 = vmul.f32 %v2044, 0.0625
    %v2099 = vmul.f32 %v2046, 0.0625
    %v2100 = vmul.f32 %v2048, 0.0625
    %v2101 = vmul.f32 %v2050, 0.0625
    %v2102 = vmul.f32 %v2052, 0.0625
    %v2103 = vmul.f32 %v2054, 0.0625
    %v2104 = vmul.f32 %v2056, 0.0625
    %v2105 = vmul.f32 %v2058, 0.0625
    %v2106 = vmul.f32 %v2060, 0.0625
    %v2107 = vmul.f32 %v2062, 0.0625
    %v2108 = vmul.f32 %v2064, 0.0625
    %v2109 = vmul.f32 %v2066, 0.0625
    %v2110 = vmul.f32 %v2068, 0.0625
    %v2111 = vmul.f32 %v2070, 0.0625
    %v2112 = vmul.f32 %v2072, 0.0625
    %v2113 = vmul.f32 %v2074, 0.0625
    %v2114 = vmul.f32 %v2076, 0.0625
    %v2115 = vmul.f32 %v2078, 0.0625
    %v2116 = vmul.f32 %v2080, 0.0625
    %v2117 = vmul.f32 %v2082, 0.0625
    %v2118 = vmul.f32 %v2084, 0.0625
    %v2119 = vmul.f32 %v2086, 0.0625
    %v2120 = vmul.f32 %v2088, 0.0625
    %v2121 = vmul.f32 %v1961, %v1961
    %v2122 = vmul.f32 %v1962, %v1962
    %v2123 = vmul.f32 %v1963, %v1963
    %v2124 = vmul.f32 %v1964, %v1964
    %v2125 = vmul.f32 %v1965, %v1965
    %v2126 = vmul.f32 %v1966, %v1966
    %v2127 = vmul.f32 %v1967, %v1967
    %v2128 = vmul.f32 %v1968, %v1968
    %v2129 = vmul.f32 %v1969, %v1969
    %v2130 = vmul.f32 %v1970, %v1970
    %v2131 = vmul.f32 %v1971, %v1971
    %v2132 = vmul.f32 %v1972, %v1972
    %v2133 = vmul.f32 %v1973, %v1973
    %v2134 = vmul.f32 %v1974, %v1974
    %v2135 = vmul.f32 %v1975, %v1975
    %v2136 = vmul.f32 %v1976, %v1976
    %v2137 = vmul.f32 %v1977, %v1977
    %v2138 = vmul.f32 %v1978, %v1978
    %v2139 = vmul.f32 %v1979, %v1979
    %v2140 = vmul.f32 %v1980, %v1980
    %v2141 = vmul.f32 %v1981, %v1981
    %v2142 = vmul.f32 %v1982, %v1982
    %v2143 = vmul.f32 %v1983, %v1983
    %v2144 = vmul.f32 %v1984, %v1984
    %v2145 = vmul.f32 %v1985, %v1985
    %v2146 = vmul.f32 %v1986, %v1986
    %v2147 = vmul.f32 %v1987, %v1987
    %v2148 = vmul.f32 %v1988, %v1988
    %v2149 = vmul.f32 %v1989, %v1989
    %v2150 = vmul.f32 %v1990, %v1990
    %v2151 = vmul.f32 %v1991, %v1991
    %v2152 = vmul.f32 %v1992, %v1992
    %v2153 = vsub.f32 %v2089, %v2121
    %v2154 = vsub.f32 %v2090, %v2122
    %v2155 = vsub.f32 %v2091, %v2123
    %v2156 = vsub.f32 %v2092, %v2124
    %v2157 = vsub.f32 %v2093, %v2125
    %v2158 = vsub.f32 %v2094, %v2126
    %v2159 = vsub.f32 %v2095, %v2127
    %v2160 = vsub.f32 %v2096, %v2128
    %v2161 = vsub.f32 %v2097, %v2129
    %v2162 = vsub.f32 %v2098, %v2130
    %v2163 = vsub.f32 %v2099, %v2131
    %v2164 = vsub.f32 %v2100, %v2132
    %v2165 = vsub.f32 %v2101, %v2133
    %v2166 = vsub.f32 %v2102, %v2134
    %v2167 = vsub.f32 %v2103, %v2135
    %v2168 = vsub.f32 %v2104, %v2136
    %v2169 = vsub.f32 %v2105, %v2137
    %v2170 = vsub.f32 %v2106, %v2138
    %v2171 = vsub.f32 %v2107, %v2139
    %v2172 = vsub.f32 %v2108, %v2140
    %v2173 = vsub.f32 %v2109, %v2141
    %v2174 = vsub.f32 %v2110, %v2142
    %v2175 = vsub.f32 %v2111, %v2143
    %v2176 = vsub.f32 %v2112, %v2144
    %v2177 = vsub.f32 %v2113, %v2145
    %v2178 = vsub.f32 %v2114, %v2146
    %v2179 = vsub.f32 %v2115, %v2147
    %v2180 = vsub.f32 %v2116, %v2148
    %v2181 = vsub.f32 %v2117, %v2149
    %v2182 = vsub.f32 %v2118, %v2150
    %v2183 = vsub.f32 %v2119, %v2151
    %v2184 = vsub.f32 %v2120, %v2152
    %v2185 = vmax.f32 %v2153, 0.0
    %v2186 = vmax.f32 %v2154, 0.0
    %v2187 = vmax.f32 %v2155, 0.0
    %v2188 = vmax.f32 %v2156, 0.0
    %v2189 = vmax.f32 %v2157, 0.0
    %v2190 = vmax.f32 %v2158, 0.0
    %v2191 = vmax.f32 %v2159, 0.0
    %v2192 = vmax.f32 %v2160, 0.0
    %v2193 = vmax.f32 %v2161, 0.0
    %v2194 = vmax.f32 %v2162, 0.0
    %v2195 = vmax.f32 %v2163, 0.0
    %v2196 = vmax.f32 %v2164, 0.0
    %v2197 = vmax.f32 %v2165, 0.0
    %v2198 = vmax.f32 %v2166, 0.0
    %v2199 = vmax.f32 %v2167, 0.0
    %v2200 = vmax.f32 %v2168, 0.0
    %v2201 = vmax.f32 %v2169, 0.0
    %v2202 = vmax.f32 %v2170, 0.0
    %v2203 = vmax.f32 %v2171, 0.0
    %v2204 = vmax.f32 %v2172, 0.0
    %v2205 = vmax.f32 %v2173, 0.0
    %v2206 = vmax.f32 %v2174, 0.0
    %v2207 = vmax.f32 %v2175, 0.0
    %v2208 = vmax.f32 %v2176, 0.0
    %v2209 = vmax.f32 %v2177, 0.0
    %v2210 = vmax.f32 %v2178, 0.0
    %v2211 = vmax.f32 %v2179, 0.0
    %v2212 = vmax.f32 %v2180, 0.0
    %v2213 = vmax.f32 %v2181, 0.0
    %v2214 = vmax.f32 %v2182, 0.0
    %v2215 = vmax.f32 %v2183, 0.0
    %v2216 = vmax.f32 %v2184, 0.0
    %v2217 = vsub.f32 %v1865, %v1961
    %v2218 = vsub.f32 %v1866, %v1962
    %v2219 = vsub.f32 %v1867, %v1963
    %v2220 = vsub.f32 %v1868, %v1964
    %v2221 = vsub.f32 %v1869, %v1965
    %v2222 = vsub.f32 %v1870, %v1966
    %v2223 = vsub.f32 %v1871, %v1967
    %v2224 = vsub.f32 %v1872, %v1968
    %v2225 = vsub.f32 %v1873, %v1969
    %v2226 = vsub.f32 %v1874, %v1970
    %v2227 = vsub.f32 %v1875, %v1971
    %v2228 = vsub.f32 %v1876, %v1972
    %v2229 = vsub.f32 %v1877, %v1973
    %v2230 = vsub.f32 %v1878, %v1974
    %v2231 = vsub.f32 %v1879, %v1975
    %v2232 = vsub.f32 %v1880, %v1976
    %v2233 = vsub.f32 %v1881, %v1977
    %v2234 = vsub.f32 %v1882, %v1978
    %v2235 = vsub.f32 %v1883, %v1979
    %v2236 = vsub.f32 %v1884, %v1980
    %v2237 = vsub.f32 %v1885, %v1981
    %v2238 = vsub.f32 %v1886, %v1982
    %v2239 = vsub.f32 %v1887, %v1983
    %v2240 = vsub.f32 %v1888, %v1984
    %v2241 = vsub.f32 %v1889, %v1985
    %v2242 = vsub.f32 %v1890, %v1986
    %v2243 = vsub.f32 %v1891, %v1987
    %v2244 = vsub.f32 %v1892, %v1988
    %v2245 = vsub.f32 %v1893, %v1989
    %v2246 = vsub.f32 %v1894, %v1990
    %v2247 = vsub.f32 %v1895, %v1991
    %v2248 = vsub.f32 %v1896, %v1992
    %v2249 = vadd.f32 %v2185, 1e-05
    %v2250 = vadd.f32 %v2186, 1e-05
    %v2251 = vadd.f32 %v2187, 1e-05
    %v2252 = vadd.f32 %v2188, 1e-05
    %v2253 = vadd.f32 %v2189, 1e-05
    %v2254 = vadd.f32 %v2190, 1e-05
    %v2255 = vadd.f32 %v2191, 1e-05
    %v2256 = vadd.f32 %v2192, 1e-05
    %v2257 = vadd.f32 %v2193, 1e-05
    %v2258 = vadd.f32 %v2194, 1e-05
    %v2259 = vadd.f32 %v2195, 1e-05
    %v2260 = vadd.f32 %v2196, 1e-05
    %v2261 = vadd.f32 %v2197, 1e-05
    %v2262 = vadd.f32 %v2198, 1e-05
    %v2263 = vadd.f32 %v2199, 1e-05
    %v2264 = vadd.f32 %v2200, 1e-05
    %v2265 = vadd.f32 %v2201, 1e-05
    %v2266 = vadd.f32 %v2202, 1e-05
    %v2267 = vadd.f32 %v2203, 1e-05
    %v2268 = vadd.f32 %v2204, 1e-05
    %v2269 = vadd.f32 %v2205, 1e-05
    %v2270 = vadd.f32 %v2206, 1e-05
    %v2271 = vadd.f32 %v2207, 1e-05
    %v2272 = vadd.f32 %v2208, 1e-05
    %v2273 = vadd.f32 %v2209, 1e-05
    %v2274 = vadd.f32 %v2210, 1e-05
    %v2275 = vadd.f32 %v2211, 1e-05
    %v2276 = vadd.f32 %v2212, 1e-05
    %v2277 = vadd.f32 %v2213, 1e-05
    %v2278 = vadd.f32 %v2214, 1e-05
    %v2279 = vadd.f32 %v2215, 1e-05
    %v2280 = vadd.f32 %v2216, 1e-05
    %v2281 = vrsqrt.pop %v2249
    %v2282 = vmul.f32 %v2281, %v2249
    %v2283 = vmul.f32 %v2282, %v2281
    %v2284 = vmul.f32 0.5, %v2283
    %v2285 = vsub.f32 1.5, %v2284
    %v2286 = vmul.f32 %v2281, %v2285
    %vm2287 = vweird.f32 %v2249
    %vm2288 = vweird.f32 %v2281
    %vm2289 = vmor %vm2287, %vm2288
    %v2290 = vsel %vm2289, %v2281, %v2286
    %v2291 = vrsqrt.pop %v2250
    %v2292 = vmul.f32 %v2291, %v2250
    %v2293 = vmul.f32 %v2292, %v2291
    %v2294 = vmul.f32 0.5, %v2293
    %v2295 = vsub.f32 1.5, %v2294
    %v2296 = vmul.f32 %v2291, %v2295
    %vm2297 = vweird.f32 %v2250
    %vm2298 = vweird.f32 %v2291
    %vm2299 = vmor %vm2297, %vm2298
    %v2300 = vsel %vm2299, %v2291, %v2296
    %v2301 = vrsqrt.pop %v2251
    %v2302 = vmul.f32 %v2301, %v2251
    %v2303 = vmul.f32 %v2302, %v2301
    %v2304 = vmul.f32 0.5, %v2303
    %v2305 = vsub.f32 1.5, %v2304
    %v2306 = vmul.f32 %v2301, %v2305
    %vm2307 = vweird.f32 %v2251
    %vm2308 = vweird.f32 %v2301
    %vm2309 = vmor %vm2307, %vm2308
    %v2310 = vsel %vm2309, %v2301, %v2306
    %v2311 = vrsqrt.pop %v2252
    %v2312 = vmul.f32 %v2311, %v2252
    %v2313 = vmul.f32 %v2312, %v2311
    %v2314 = vmul.f32 0.5, %v2313
    %v2315 = vsub.f32 1.5, %v2314
    %v2316 = vmul.f32 %v2311, %v2315
    %vm2317 = vweird.f32 %v2252
    %vm2318 = vweird.f32 %v2311
    %vm2319 = vmor %vm2317, %vm2318
    %v2320 = vsel %vm2319, %v2311, %v2316
    %v2321 = vrsqrt.pop %v2253
    %v2322 = vmul.f32 %v2321, %v2253
    %v2323 = vmul.f32 %v2322, %v2321
    %v2324 = vmul.f32 0.5, %v2323
    %v2325 = vsub.f32 1.5, %v2324
    %v2326 = vmul.f32 %v2321, %v2325
    %vm2327 = vweird.f32 %v2253
    %vm2328 = vweird.f32 %v2321
    %vm2329 = vmor %vm2327, %vm2328
    %v2330 = vsel %vm2329, %v2321, %v2326
    %v2331 = vrsqrt.pop %v2254
    %v2332 = vmul.f32 %v2331, %v2254
    %v2333 = vmul.f32 %v2332, %v2331
    %v2334 = vmul.f32 0.5, %v2333
    %v2335 = vsub.f32 1.5, %v2334
    %v2336 = vmul.f32 %v2331, %v2335
    %vm2337 = vweird.f32 %v2254
    %vm2338 = vweird.f32 %v2331
    %vm2339 = vmor %vm2337, %vm2338
    %v2340 = vsel %vm2339, %v2331, %v2336
    %v2341 = vrsqrt.pop %v2255
    %v2342 = vmul.f32 %v2341, %v2255
    %v2343 = vmul.f32 %v2342, %v2341
    %v2344 = vmul.f32 0.5, %v2343
    %v2345 = vsub.f32 1.5, %v2344
    %v2346 = vmul.f32 %v2341, %v2345
    %vm2347 = vweird.f32 %v2255
    %vm2348 = vweird.f32 %v2341
    %vm2349 = vmor %vm2347, %vm2348
    %v2350 = vsel %vm2349, %v2341, %v2346
    %v2351 = vrsqrt.pop %v2256
    %v2352 = vmul.f32 %v2351, %v2256
    %v2353 = vmul.f32 %v2352, %v2351
    %v2354 = vmul.f32 0.5, %v2353
    %v2355 = vsub.f32 1.5, %v2354
    %v2356 = vmul.f32 %v2351, %v2355
    %vm2357 = vweird.f32 %v2256
    %vm2358 = vweird.f32 %v2351
    %vm2359 = vmor %vm2357, %vm2358
    %v2360 = vsel %vm2359, %v2351, %v2356
    %v2361 = vrsqrt.pop %v2257
    %v2362 = vmul.f32 %v2361, %v2257
    %v2363 = vmul.f32 %v2362, %v2361
    %v2364 = vmul.f32 0.5, %v2363
    %v2365 = vsub.f32 1.5, %v2364
    %v2366 = vmul.f32 %v2361, %v2365
    %vm2367 = vweird.f32 %v2257
    %vm2368 = vweird.f32 %v2361
    %vm2369 = vmor %vm2367, %vm2368
    %v2370 = vsel %vm2369, %v2361, %v2366
    %v2371 = vrsqrt.pop %v2258
    %v2372 = vmul.f32 %v2371, %v2258
    %v2373 = vmul.f32 %v2372, %v2371
    %v2374 = vmul.f32 0.5, %v2373
    %v2375 = vsub.f32 1.5, %v2374
    %v2376 = vmul.f32 %v2371, %v2375
    %vm2377 = vweird.f32 %v2258
    %vm2378 = vweird.f32 %v2371
    %vm2379 = vmor %vm2377, %vm2378
    %v2380 = vsel %vm2379, %v2371, %v2376
    %v2381 = vrsqrt.pop %v2259
    %v2382 = vmul.f32 %v2381, %v2259
    %v2383 = vmul.f32 %v2382, %v2381
    %v2384 = vmul.f32 0.5, %v2383
    %v2385 = vsub.f32 1.5, %v2384
    %v2386 = vmul.f32 %v2381, %v2385
    %vm2387 = vweird.f32 %v2259
    %vm2388 = vweird.f32 %v2381
    %vm2389 = vmor %vm2387, %vm2388
    %v2390 = vsel %vm2389, %v2381, %v2386
    %v2391 = vrsqrt.pop %v2260
    %v2392 = vmul.f32 %v2391, %v2260
    %v2393 = vmul.f32 %v2392, %v2391
    %v2394 = vmul.f32 0.5, %v2393
    %v2395 = vsub.f32 1.5, %v2394
    %v2396 = vmul.f32 %v2391, %v2395
    %vm2397 = vweird.f32 %v2260
    %vm2398 = vweird.f32 %v2391
    %vm2399 = vmor %vm2397, %vm2398
    %v2400 = vsel %vm2399, %v2391, %v2396
    %v2401 = vrsqrt.pop %v2261
    %v2402 = vmul.f32 %v2401, %v2261
    %v2403 = vmul.f32 %v2402, %v2401
    %v2404 = vmul.f32 0.5, %v2403
    %v2405 = vsub.f32 1.5, %v2404
    %v2406 = vmul.f32 %v2401, %v2405
    %vm2407 = vweird.f32 %v2261
    %vm2408 = vweird.f32 %v2401
    %vm2409 = vmor %vm2407, %vm2408
    %v2410 = vsel %vm2409, %v2401, %v2406
    %v2411 = vrsqrt.pop %v2262
    %v2412 = vmul.f32 %v2411, %v2262
    %v2413 = vmul.f32 %v2412, %v2411
    %v2414 = vmul.f32 0.5, %v2413
    %v2415 = vsub.f32 1.5, %v2414
    %v2416 = vmul.f32 %v2411, %v2415
    %vm2417 = vweird.f32 %v2262
    %vm2418 = vweird.f32 %v2411
    %vm2419 = vmor %vm2417, %vm2418
    %v2420 = vsel %vm2419, %v2411, %v2416
    %v2421 = vrsqrt.pop %v2263
    %v2422 = vmul.f32 %v2421, %v2263
    %v2423 = vmul.f32 %v2422, %v2421
    %v2424 = vmul.f32 0.5, %v2423
    %v2425 = vsub.f32 1.5, %v2424
    %v2426 = vmul.f32 %v2421, %v2425
    %vm2427 = vweird.f32 %v2263
    %vm2428 = vweird.f32 %v2421
    %vm2429 = vmor %vm2427, %vm2428
    %v2430 = vsel %vm2429, %v2421, %v2426
    %v2431 = vrsqrt.pop %v2264
    %v2432 = vmul.f32 %v2431, %v2264
    %v2433 = vmul.f32 %v2432, %v2431
    %v2434 = vmul.f32 0.5, %v2433
    %v2435 = vsub.f32 1.5, %v2434
    %v2436 = vmul.f32 %v2431, %v2435
    %vm2437 = vweird.f32 %v2264
    %vm2438 = vweird.f32 %v2431
    %vm2439 = vmor %vm2437, %vm2438
    %v2440 = vsel %vm2439, %v2431, %v2436
    %v2441 = vrsqrt.pop %v2265
    %v2442 = vmul.f32 %v2441, %v2265
    %v2443 = vmul.f32 %v2442, %v2441
    %v2444 = vmul.f32 0.5, %v2443
    %v2445 = vsub.f32 1.5, %v2444
    %v2446 = vmul.f32 %v2441, %v2445
    %vm2447 = vweird.f32 %v2265
    %vm2448 = vweird.f32 %v2441
    %vm2449 = vmor %vm2447, %vm2448
    %v2450 = vsel %vm2449, %v2441, %v2446
    %v2451 = vrsqrt.pop %v2266
    %v2452 = vmul.f32 %v2451, %v2266
    %v2453 = vmul.f32 %v2452, %v2451
    %v2454 = vmul.f32 0.5, %v2453
    %v2455 = vsub.f32 1.5, %v2454
    %v2456 = vmul.f32 %v2451, %v2455
    %vm2457 = vweird.f32 %v2266
    %vm2458 = vweird.f32 %v2451
    %vm2459 = vmor %vm2457, %vm2458
    %v2460 = vsel %vm2459, %v2451, %v2456
    %v2461 = vrsqrt.pop %v2267
    %v2462 = vmul.f32 %v2461, %v2267
    %v2463 = vmul.f32 %v2462, %v2461
    %v2464 = vmul.f32 0.5, %v2463
    %v2465 = vsub.f32 1.5, %v2464
    %v2466 = vmul.f32 %v2461, %v2465
    %vm2467 = vweird.f32 %v2267
    %vm2468 = vweird.f32 %v2461
    %vm2469 = vmor %vm2467, %vm2468
    %v2470 = vsel %vm2469, %v2461, %v2466
    %v2471 = vrsqrt.pop %v2268
    %v2472 = vmul.f32 %v2471, %v2268
    %v2473 = vmul.f32 %v2472, %v2471
    %v2474 = vmul.f32 0.5, %v2473
    %v2475 = vsub.f32 1.5, %v2474
    %v2476 = vmul.f32 %v2471, %v2475
    %vm2477 = vweird.f32 %v2268
    %vm2478 = vweird.f32 %v2471
    %vm2479 = vmor %vm2477, %vm2478
    %v2480 = vsel %vm2479, %v2471, %v2476
    %v2481 = vrsqrt.pop %v2269
    %v2482 = vmul.f32 %v2481, %v2269
    %v2483 = vmul.f32 %v2482, %v2481
    %v2484 = vmul.f32 0.5, %v2483
    %v2485 = vsub.f32 1.5, %v2484
    %v2486 = vmul.f32 %v2481, %v2485
    %vm2487 = vweird.f32 %v2269
    %vm2488 = vweird.f32 %v2481
    %vm2489 = vmor %vm2487, %vm2488
    %v2490 = vsel %vm2489, %v2481, %v2486
    %v2491 = vrsqrt.pop %v2270
    %v2492 = vmul.f32 %v2491, %v2270
    %v2493 = vmul.f32 %v2492, %v2491
    %v2494 = vmul.f32 0.5, %v2493
    %v2495 = vsub.f32 1.5, %v2494
    %v2496 = vmul.f32 %v2491, %v2495
    %vm2497 = vweird.f32 %v2270
    %vm2498 = vweird.f32 %v2491
    %vm2499 = vmor %vm2497, %vm2498
    %v2500 = vsel %vm2499, %v2491, %v2496
    %v2501 = vrsqrt.pop %v2271
    %v2502 = vmul.f32 %v2501, %v2271
    %v2503 = vmul.f32 %v2502, %v2501
    %v2504 = vmul.f32 0.5, %v2503
    %v2505 = vsub.f32 1.5, %v2504
    %v2506 = vmul.f32 %v2501, %v2505
    %vm2507 = vweird.f32 %v2271
    %vm2508 = vweird.f32 %v2501
    %vm2509 = vmor %vm2507, %vm2508
    %v2510 = vsel %vm2509, %v2501, %v2506
    %v2511 = vrsqrt.pop %v2272
    %v2512 = vmul.f32 %v2511, %v2272
    %v2513 = vmul.f32 %v2512, %v2511
    %v2514 = vmul.f32 0.5, %v2513
    %v2515 = vsub.f32 1.5, %v2514
    %v2516 = vmul.f32 %v2511, %v2515
    %vm2517 = vweird.f32 %v2272
    %vm2518 = vweird.f32 %v2511
    %vm2519 = vmor %vm2517, %vm2518
    %v2520 = vsel %vm2519, %v2511, %v2516
    %v2521 = vrsqrt.pop %v2273
    %v2522 = vmul.f32 %v2521, %v2273
    %v2523 = vmul.f32 %v2522, %v2521
    %v2524 = vmul.f32 0.5, %v2523
    %v2525 = vsub.f32 1.5, %v2524
    %v2526 = vmul.f32 %v2521, %v2525
    %vm2527 = vweird.f32 %v2273
    %vm2528 = vweird.f32 %v2521
    %vm2529 = vmor %vm2527, %vm2528
    %v2530 = vsel %vm2529, %v2521, %v2526
    %v2531 = vrsqrt.pop %v2274
    %v2532 = vmul.f32 %v2531, %v2274
    %v2533 = vmul.f32 %v2532, %v2531
    %v2534 = vmul.f32 0.5, %v2533
    %v2535 = vsub.f32 1.5, %v2534
    %v2536 = vmul.f32 %v2531, %v2535
    %vm2537 = vweird.f32 %v2274
    %vm2538 = vweird.f32 %v2531
    %vm2539 = vmor %vm2537, %vm2538
    %v2540 = vsel %vm2539, %v2531, %v2536
    %v2541 = vrsqrt.pop %v2275
    %v2542 = vmul.f32 %v2541, %v2275
    %v2543 = vmul.f32 %v2542, %v2541
    %v2544 = vmul.f32 0.5, %v2543
    %v2545 = vsub.f32 1.5, %v2544
    %v2546 = vmul.f32 %v2541, %v2545
    %vm2547 = vweird.f32 %v2275
    %vm2548 = vweird.f32 %v2541
    %vm2549 = vmor %vm2547, %vm2548
    %v2550 = vsel %vm2549, %v2541, %v2546
    %v2551 = vrsqrt.pop %v2276
    %v2552 = vmul.f32 %v2551, %v2276
    %v2553 = vmul.f32 %v2552, %v2551
    %v2554 = vmul.f32 0.5, %v2553
    %v2555 = vsub.f32 1.5, %v2554
    %v2556 = vmul.f32 %v2551, %v2555
    %vm2557 = vweird.f32 %v2276
    %vm2558 = vweird.f32 %v2551
    %vm2559 = vmor %vm2557, %vm2558
    %v2560 = vsel %vm2559, %v2551, %v2556
    %v2561 = vrsqrt.pop %v2277
    %v2562 = vmul.f32 %v2561, %v2277
    %v2563 = vmul.f32 %v2562, %v2561
    %v2564 = vmul.f32 0.5, %v2563
    %v2565 = vsub.f32 1.5, %v2564
    %v2566 = vmul.f32 %v2561, %v2565
    %vm2567 = vweird.f32 %v2277
    %vm2568 = vweird.f32 %v2561
    %vm2569 = vmor %vm2567, %vm2568
    %v2570 = vsel %vm2569, %v2561, %v2566
    %v2571 = vrsqrt.pop %v2278
    %v2572 = vmul.f32 %v2571, %v2278
    %v2573 = vmul.f32 %v2572, %v2571
    %v2574 = vmul.f32 0.5, %v2573
    %v2575 = vsub.f32 1.5, %v2574
    %v2576 = vmul.f32 %v2571, %v2575
    %vm2577 = vweird.f32 %v2278
    %vm2578 = vweird.f32 %v2571
    %vm2579 = vmor %vm2577, %vm2578
    %v2580 = vsel %vm2579, %v2571, %v2576
    %v2581 = vrsqrt.pop %v2279
    %v2582 = vmul.f32 %v2581, %v2279
    %v2583 = vmul.f32 %v2582, %v2581
    %v2584 = vmul.f32 0.5, %v2583
    %v2585 = vsub.f32 1.5, %v2584
    %v2586 = vmul.f32 %v2581, %v2585
    %vm2587 = vweird.f32 %v2279
    %vm2588 = vweird.f32 %v2581
    %vm2589 = vmor %vm2587, %vm2588
    %v2590 = vsel %vm2589, %v2581, %v2586
    %v2591 = vrsqrt.pop %v2280
    %v2592 = vmul.f32 %v2591, %v2280
    %v2593 = vmul.f32 %v2592, %v2591
    %v2594 = vmul.f32 0.5, %v2593
    %v2595 = vsub.f32 1.5, %v2594
    %v2596 = vmul.f32 %v2591, %v2595
    %vm2597 = vweird.f32 %v2280
    %vm2598 = vweird.f32 %v2591
    %vm2599 = vmor %vm2597, %vm2598
    %v2600 = vsel %vm2599, %v2591, %v2596
    %v2601 = vmul.f32 %v2217, %v2290
    %v2602 = vmul.f32 %v2218, %v2300
    %v2603 = vmul.f32 %v2219, %v2310
    %v2604 = vmul.f32 %v2220, %v2320
    %v2605 = vmul.f32 %v2221, %v2330
    %v2606 = vmul.f32 %v2222, %v2340
    %v2607 = vmul.f32 %v2223, %v2350
    %v2608 = vmul.f32 %v2224, %v2360
    %v2609 = vmul.f32 %v2225, %v2370
    %v2610 = vmul.f32 %v2226, %v2380
    %v2611 = vmul.f32 %v2227, %v2390
    %v2612 = vmul.f32 %v2228, %v2400
    %v2613 = vmul.f32 %v2229, %v2410
    %v2614 = vmul.f32 %v2230, %v2420
    %v2615 = vmul.f32 %v2231, %v2430
    %v2616 = vmul.f32 %v2232, %v2440
    %v2617 = vmul.f32 %v2233, %v2450
    %v2618 = vmul.f32 %v2234, %v2460
    %v2619 = vmul.f32 %v2235, %v2470
    %v2620 = vmul.f32 %v2236, %v2480
    %v2621 = vmul.f32 %v2237, %v2490
    %v2622 = vmul.f32 %v2238, %v2500
    %v2623 = vmul.f32 %v2239, %v2510
    %v2624 = vmul.f32 %v2240, %v2520
    %v2625 = vmul.f32 %v2241, %v2530
    %v2626 = vmul.f32 %v2242, %v2540
    %v2627 = vmul.f32 %v2243, %v2550
    %v2628 = vmul.f32 %v2244, %v2560
    %v2629 = vmul.f32 %v2245, %v2570
    %v2630 = vmul.f32 %v2246, %v2580
    %v2631 = vmul.f32 %v2247, %v2590
    %v2632 = vmul.f32 %v2248, %v2600
    %v2633 = vld [vmem:[%s8] sm:$0x1]
    %v2635 = vperm.slane %v2633, 0
    %v2637 = vmul.f32 %v2601, %v2635
    %v2638 = vmul.f32 %v2602, %v2635
    %v2639 = vmul.f32 %v2603, %v2635
    %v2640 = vmul.f32 %v2604, %v2635
    %v2641 = vmul.f32 %v2605, %v2635
    %v2642 = vmul.f32 %v2606, %v2635
    %v2643 = vmul.f32 %v2607, %v2635
    %v2644 = vmul.f32 %v2608, %v2635
    %v2645 = vmul.f32 %v2609, %v2635
    %v2646 = vmul.f32 %v2610, %v2635
    %v2647 = vmul.f32 %v2611, %v2635
    %v2648 = vmul.f32 %v2612, %v2635
    %v2649 = vmul.f32 %v2613, %v2635
    %v2650 = vmul.f32 %v2614, %v2635
    %v2651 = vmul.f32 %v2615, %v2635
    %v2652 = vmul.f32 %v2616, %v2635
    %v2653 = vmul.f32 %v2617, %v2635
    %v2654 = vmul.f32 %v2618, %v2635
    %v2655 = vmul.f32 %v2619, %v2635
    %v2656 = vmul.f32 %v2620, %v2635
    %v2657 = vmul.f32 %v2621, %v2635
    %v2658 = vmul.f32 %v2622, %v2635
    %v2659 = vmul.f32 %v2623, %v2635
    %v2660 = vmul.f32 %v2624, %v2635
    %v2661 = vmul.f32 %v2625, %v2635
    %v2662 = vmul.f32 %v2626, %v2635
    %v2663 = vmul.f32 %v2627, %v2635
    %v2664 = vmul.f32 %v2628, %v2635
    %v2665 = vmul.f32 %v2629, %v2635
    %v2666 = vmul.f32 %v2630, %v2635
    %v2667 = vmul.f32 %v2631, %v2635
    %v2668 = vmul.f32 %v2632, %v2635
    %v2669 = vld [vmem:[%s9] sm:$0x1]
    %v2671 = vperm.slane %v2669, 0
    %v2673 = vadd.f32 %v2637, %v2671
    %v2674 = vadd.f32 %v2638, %v2671
    %v2675 = vadd.f32 %v2639, %v2671
    %v2676 = vadd.f32 %v2640, %v2671
    %v2677 = vadd.f32 %v2641, %v2671
    %v2678 = vadd.f32 %v2642, %v2671
    %v2679 = vadd.f32 %v2643, %v2671
    %v2680 = vadd.f32 %v2644, %v2671
    %v2681 = vadd.f32 %v2645, %v2671
    %v2682 = vadd.f32 %v2646, %v2671
    %v2683 = vadd.f32 %v2647, %v2671
    %v2684 = vadd.f32 %v2648, %v2671
    %v2685 = vadd.f32 %v2649, %v2671
    %v2686 = vadd.f32 %v2650, %v2671
    %v2687 = vadd.f32 %v2651, %v2671
    %v2688 = vadd.f32 %v2652, %v2671
    %v2689 = vadd.f32 %v2653, %v2671
    %v2690 = vadd.f32 %v2654, %v2671
    %v2691 = vadd.f32 %v2655, %v2671
    %v2692 = vadd.f32 %v2656, %v2671
    %v2693 = vadd.f32 %v2657, %v2671
    %v2694 = vadd.f32 %v2658, %v2671
    %v2695 = vadd.f32 %v2659, %v2671
    %v2696 = vadd.f32 %v2660, %v2671
    %v2697 = vadd.f32 %v2661, %v2671
    %v2698 = vadd.f32 %v2662, %v2671
    %v2699 = vadd.f32 %v2663, %v2671
    %v2700 = vadd.f32 %v2664, %v2671
    %v2701 = vadd.f32 %v2665, %v2671
    %v2702 = vadd.f32 %v2666, %v2671
    %v2703 = vadd.f32 %v2667, %v2671
    %v2704 = vadd.f32 %v2668, %v2671
    %v2705 = vpack.c.bf16 %v2673, %v2673
    %v2706 = vpack.c.bf16 %v2674, %v2674
    %v2707 = vpack.c.bf16 %v2675, %v2675
    %v2708 = vpack.c.bf16 %v2676, %v2676
    %v2709 = vpack.c.bf16 %v2677, %v2677
    %v2710 = vpack.c.bf16 %v2678, %v2678
    %v2711 = vpack.c.bf16 %v2679, %v2679
    %v2712 = vpack.c.bf16 %v2680, %v2680
    %v2713 = vpack.c.bf16 %v2681, %v2681
    %v2714 = vpack.c.bf16 %v2682, %v2682
    %v2715 = vpack.c.bf16 %v2683, %v2683
    %v2716 = vpack.c.bf16 %v2684, %v2684
    %v2717 = vpack.c.bf16 %v2685, %v2685
    %v2718 = vpack.c.bf16 %v2686, %v2686
    %v2719 = vpack.c.bf16 %v2687, %v2687
    %v2720 = vpack.c.bf16 %v2688, %v2688
    %v2721 = vpack.c.bf16 %v2689, %v2689
    %v2722 = vpack.c.bf16 %v2690, %v2690
    %v2723 = vpack.c.bf16 %v2691, %v2691
    %v2724 = vpack.c.bf16 %v2692, %v2692
    %v2725 = vpack.c.bf16 %v2693, %v2693
    %v2726 = vpack.c.bf16 %v2694, %v2694
    %v2727 = vpack.c.bf16 %v2695, %v2695
    %v2728 = vpack.c.bf16 %v2696, %v2696
    %v2729 = vpack.c.bf16 %v2697, %v2697
    %v2730 = vpack.c.bf16 %v2698, %v2698
    %v2731 = vpack.c.bf16 %v2699, %v2699
    %v2732 = vpack.c.bf16 %v2700, %v2700
    %v2733 = vpack.c.bf16 %v2701, %v2701
    %v2734 = vpack.c.bf16 %v2702, %v2702
    %v2735 = vpack.c.bf16 %v2703, %v2703
    %v2736 = vpack.c.bf16 %v2704, %v2704
    %2737 = vst [vmem:[#allocation10] sm:$0xf] %v2705
    %2738 = vst [vmem:[#allocation10 + $0x4] sm:$0xf] %v2706
    %2739 = vst [vmem:[#allocation10 + $0x8] sm:$0xf] %v2707
    %2740 = vst [vmem:[#allocation10 + $0xc] sm:$0xf] %v2708
    %2741 = vst [vmem:[#allocation10 + $0x10] sm:$0xf] %v2709
    %2742 = vst [vmem:[#allocation10 + $0x14] sm:$0xf] %v2710
    %2743 = vst [vmem:[#allocation10 + $0x18] sm:$0xf] %v2711
    %2744 = vst [vmem:[#allocation10 + $0x1c] sm:$0xf] %v2712
    %2745 = vst [vmem:[#allocation10 + $0x20] sm:$0xf] %v2713
    %2746 = vst [vmem:[#allocation10 + $0x24] sm:$0xf] %v2714
    %2747 = vst [vmem:[#allocation10 + $0x28] sm:$0xf] %v2715
    %2748 = vst [vmem:[#allocation10 + $0x2c] sm:$0xf] %v2716
    %2749 = vst [vmem:[#allocation10 + $0x30] sm:$0xf] %v2717
    %2750 = vst [vmem:[#allocation10 + $0x34] sm:$0xf] %v2718
    %2751 = vst [vmem:[#allocation10 + $0x38] sm:$0xf] %v2719
    %2752 = vst [vmem:[#allocation10 + $0x3c] sm:$0xf] %v2720
    %2753 = vst [vmem:[#allocation10 + $0x40] sm:$0xf] %v2721
    %2754 = vst [vmem:[#allocation10 + $0x44] sm:$0xf] %v2722
    %2755 = vst [vmem:[#allocation10 + $0x48] sm:$0xf] %v2723
    %2756 = vst [vmem:[#allocation10 + $0x4c] sm:$0xf] %v2724
    %2757 = vst [vmem:[#allocation10 + $0x50] sm:$0xf] %v2725
    %2758 = vst [vmem:[#allocation10 + $0x54] sm:$0xf] %v2726
    %2759 = vst [vmem:[#allocation10 + $0x58] sm:$0xf] %v2727
    %2760 = vst [vmem:[#allocation10 + $0x5c] sm:$0xf] %v2728
    %2761 = vst [vmem:[#allocation10 + $0x60] sm:$0xf] %v2729
    %2762 = vst [vmem:[#allocation10 + $0x64] sm:$0xf] %v2730
    %2763 = vst [vmem:[#allocation10 + $0x68] sm:$0xf] %v2731
    %2764 = vst [vmem:[#allocation10 + $0x6c] sm:$0xf] %v2732
    %2765 = vst [vmem:[#allocation10 + $0x70] sm:$0xf] %v2733
    %2766 = vst [vmem:[#allocation10 + $0x74] sm:$0xf] %v2734
    %2767 = vst [vmem:[#allocation10 + $0x78] sm:$0xf] %v2735
    %2768 = vst [vmem:[#allocation10 + $0x7c] sm:$0xf] %v2736
    // Predicated region
    $region58: #{tpu_custom_call.1} parent=1 // pred_check
      _
    $region59: #{tpu_custom_call.1} parent=1 // pred_check_branch
      %2770 = sbr.rel (0) target = $region61
    $region60: #{tpu_custom_call.1} parent=1 // pred_region
      %2772 = vsyncadd [#allocation4], 0
      %s2773 = sshll.u32 [#allocation10], 4
      %s2774 = int_to_ptr.vmem [resolvable:$true] %s2773
      %s2775 = sshll.u32 %s10, 4
      %s2776 = int_to_ptr.hbm [resolvable:$true] %s2775
      %2781 = dma.vmem_to_hbm [thread:$0]  %s2774, 2048, %s2776, [#allocation4], 64, 64, 4
    $region61: #{tpu_custom_call.1} parent=1 // pred_fallthru
      _
    // Predicated region
    $region62: #{tpu_custom_call.1} parent=1 // pred_check
      _
    $region63: #{tpu_custom_call.1} parent=1 // pred_check_branch
      %2783 = sbr.rel (0) target = $region65
    $region64: #{tpu_custom_call.1} parent=1 // pred_region
      %2785 = dma.done [#allocation4], 2048
    $region65: #{tpu_custom_call.1} parent=1 // pred_fallthru
      _
    %2786 = vsyncpa [#allocation3], 1
    %2787 = vsyncpa [#allocation6], 1
    %2788 = vsyncpa [#allocation9], 1
    %2789 = vsyncpa [#allocation4], 1

</llo_original>
